<compile_context>
chip_gen: v7x
topology: tpu7x:2x2x1
jax: 0.10.0
libtpu: 0.0.40
codegen_flags: <defaults>
</compile_context>

<pallas_src>
import functools
import math

import numpy as np
import jax
import jax.numpy as jnp
from jax.experimental import pallas as pl
from jax.experimental.pallas import tpu as pltpu


# ----------------------------- Pallas kernel --------------------------------


def _bottleneck_sge_kernel(x_ref, mask_ref, w1_ref, t1_ref, w2_ref, t2_ref,
                           w3_ref, t3_ref, gsum_ref, gexp_ref, sgw_ref,
                           sgb_ref, o_ref, *, width):
    f32 = jnp.float32
    bf16 = jnp.bfloat16

    x = x_ref[...]                                         # (Cin, HW) f32
    hw = x.shape[1]

    # --- conv1 (1x1) + BN1 (scale folded into w1) + ReLU --------------------
    y1 = jnp.dot(w1_ref[...], x.astype(bf16), preferred_element_type=f32)
    y1 = jnp.maximum(y1 + t1_ref[...], 0.0)                # (P, HW) f32

    # --- conv2 (3x3, pad=1, stride=1) + BN2 + ReLU ---------------------------
    # Each of the 9 taps is y1 shifted by (dh*W + dw) along the flattened HW
    # (lane) axis.  Shifts are static lane slices of an aligned self-concat
    # (equivalent to pltpu.roll lane rotations on the XLU); out-of-image
    # neighbours are zeroed by precomputed (1, HW) masks.
    y1d = jnp.concatenate([y1, y1], axis=1)                # (P, 2*HW)
    taps = []
    for kh in range(3):
        for kw in range(3):
            off = (kh - 1) * width + (kw - 1)              # flat neighbour offset
            if off == 0:
                taps.append(y1)                            # centre tap, no mask
            else:
                start = off % hw
                shifted = y1d[:, start:start + hw]         # = y1[:, (i+off) % hw]
                taps.append(shifted * mask_ref[kh * 3 + kw])
    # One fused MXU matmul with K = 9*P (single weight push, no 9 small dots).
    taps = jnp.concatenate(taps, axis=0).astype(bf16)      # (9P, HW)
    y2 = jnp.dot(w2_ref[...], taps, preferred_element_type=f32)
    y2 = jnp.maximum(y2 + t2_ref[...], 0.0)                # (P, HW)

    # --- conv3 (1x1) + BN3 (no ReLU before SGE) ------------------------------
    y3 = jnp.dot(w3_ref[...], y2.astype(bf16), preferred_element_type=f32)
    y3 = y3 + t3_ref[...]                                  # (Cout, HW)

    # --- SpatialGroupEnhance (groups = G), f32 epilogue ----------------------
    m = jnp.mean(y3, axis=1, keepdims=True)                # adaptive avg pool (Cout,1)
    t = jnp.dot(gsum_ref[...], y3 * m,
                preferred_element_type=f32)                # per-group sum, (G, HW)
    t_mean = jnp.mean(t, axis=1, keepdims=True)
    tc = t - t_mean
    var = jnp.sum(tc * tc, axis=1, keepdims=True) / (hw - 1)   # torch .std(): unbiased
    tn = tc / (jnp.sqrt(var) + 1e-5)
    z = tn * sgw_ref[...] + sgb_ref[...]
    gate = pl.reciprocal(1.0 + jnp.exp(-z), approx=True)   # sigmoid (EUP), (G, HW)
    gate_c = jnp.dot(gexp_ref[...], gate,
                     preferred_element_type=f32)           # broadcast to channels

    # --- residual add + final ReLU (downsample is None); lane-dense store ----
    o_ref[...] = jnp.maximum(y3 * gate_c + x, 0.0)


# ----------------------------- host-side wrapper -----------------------------


def _conv3x3_tap_masks(H, W):
    """masks[k, 0, h*W+w] = 1 iff the (kh,kw) neighbour of (h,w) is in-image."""
    h = np.arange(H)[:, None]
    w = np.arange(W)[None, :]
    masks = np.empty((9, 1, H * W), np.float32)
    for kh in range(3):
        for kw in range(3):
            valid = ((h + kh - 1 >= 0) & (h + kh - 1 < H) &
                     (w + kw - 1 >= 0) & (w + kw - 1 < W))
            masks[kh * 3 + kw, 0, :] = valid.reshape(-1).astype(np.float32)
    return masks


def bottleneck_forward(x_nchw, params, *, groups=16):
    N, Cin, H, W = x_nchw.shape
    P = params["w1"].shape[0]
    Cout = params["w3"].shape[0]
    # TODO(synk): stride>1 / downsample branch not implemented (reference config
    # has inplanes == planes*expansion and stride=1, i.e. downsample=None).
    assert Cin == Cout and Cout % groups == 0
    HW = H * W
    cpg = Cout // groups

    def fold_bn(g, b, mean, var, eps=1e-5):
        s = g / jnp.sqrt(var + eps)
        return s, (b - mean * s)

    s1, t1 = fold_bn(params["bn1_g"], params["bn1_b"], params["bn1_m"], params["bn1_v"])
    s2, t2 = fold_bn(params["bn2_g"], params["bn2_b"], params["bn2_m"], params["bn2_v"])
    s3, t3 = fold_bn(params["bn3_g"], params["bn3_b"], params["bn3_m"], params["bn3_v"])

    # BN scales folded into conv weights; weights pre-cast to bf16 (MXU-native).
    w1 = (s1[:, None] * params["w1"][:, :, 0, 0]).astype(jnp.bfloat16)       # (P, Cin)
    w2 = jnp.transpose(params["w2"], (2, 3, 0, 1)).reshape(9, P, P)          # (k, Pout, Pin)
    w2 = s2[None, :, None] * w2
    w2cat = jnp.transpose(w2, (1, 0, 2)).reshape(P, 9 * P).astype(jnp.bfloat16)
    w3 = (s3[:, None] * params["w3"][:, :, 0, 0]).astype(jnp.bfloat16)       # (Cout, P)

    t1 = t1.reshape(P, 1).astype(jnp.float32)
    t2 = t2.reshape(P, 1).astype(jnp.float32)
    t3 = t3.reshape(Cout, 1).astype(jnp.float32)

    masks = jnp.asarray(_conv3x3_tap_masks(H, W))                            # (9, 1, HW)

    # SGE group-sum / group-broadcast 0/1 matrices (kept f32 for precision).
    gsum = (jnp.arange(Cout)[None, :] // cpg ==
            jnp.arange(groups)[:, None]).astype(jnp.float32)                 # (G, Cout)
    gexp = gsum.T                                                            # (Cout, G)
    sgw = params["sge_w"].reshape(groups, 1).astype(jnp.float32)
    sgb = params["sge_b"].reshape(groups, 1).astype(jnp.float32)

    # Channels-first slab (N, C, HW): pure reshape from NCHW (no transposes),
    # lane-dense (C, HW>=128) tiles inside the kernel.
    x_cf = x_nchw.reshape(N, Cin, HW).astype(jnp.float32)

    const2d = lambda n: (0, 0)
    const3d = lambda n: (0, 0, 0)
    out = pl.pallas_call(
        functools.partial(_bottleneck_sge_kernel, width=W),
        out_shape=jax.ShapeDtypeStruct((N, Cout, HW), jnp.float32),
        grid=(N,),        # one image per step; N>=2 keeps both v7x TCs busy
        in_specs=[
            pl.BlockSpec((pl.Squeezed(), Cin, HW), lambda n: (n, 0, 0)),   # x / identity
            pl.BlockSpec((9, 1, HW), const3d),                             # conv2 tap masks
            pl.BlockSpec((P, Cin), const2d),                               # w1 (bf16, BN1 folded)
            pl.BlockSpec((P, 1), const2d),                                 # bn1 shift
            pl.BlockSpec((P, 9 * P), const2d),                             # w2 taps fused along K
            pl.BlockSpec((P, 1), const2d),                                 # bn2 shift
            pl.BlockSpec((Cout, P), const2d),                              # w3 (bf16, BN3 folded)
            pl.BlockSpec((Cout, 1), const2d),                              # bn3 shift
            pl.BlockSpec((groups, Cout), const2d),                         # group-sum matrix
            pl.BlockSpec((Cout, groups), const2d),                         # group-expand matrix
            pl.BlockSpec((groups, 1), const2d),                            # sge weight
            pl.BlockSpec((groups, 1), const2d),                            # sge bias
        ],
        out_specs=pl.BlockSpec((pl.Squeezed(), Cout, HW), lambda n: (n, 0, 0)),
        compiler_params=pltpu.CompilerParams(
            dimension_semantics=("parallel",)),
    )(x_cf, masks, w1, t1, w2cat, t2, w3, t3, gsum, gexp, sgw, sgb)

    return out.reshape(N, Cout, H, W)


# ----------------------------- numpy reference -------------------------------


def _np_bn(y, g, b, mean, var, eps=1e-5):
    return (g[None, :, None, None] * (y - mean[None, :, None, None]) /
            np.sqrt(var[None, :, None, None] + eps) + b[None, :, None, None])


def _np_conv1x1(x, w):                       # w: (Cout, Cin, 1, 1)
    return np.einsum("nchw,oc->nohw", x, w[:, :, 0, 0])


def _np_conv3x3(x, w):                       # w: (Cout, Cin, 3, 3), pad=1, stride=1
    n, c, h, wi = x.shape
    xp = np.pad(x, ((0, 0), (0, 0), (1, 1), (1, 1)))
    out = np.zeros((n, w.shape[0], h, wi), dtype=x.dtype)
    for kh in range(3):
        for kw in range(3):
            out += np.einsum("nchw,oc->nohw",
                             xp[:, :, kh:kh + h, kw:kw + wi], w[:, :, kh, kw])
    return out


def _np_sge(x, weight, bias, groups):
    b, c, h, w = x.shape
    xg = x.reshape(b * groups, c // groups, h, w)
    pooled = xg.mean(axis=(2, 3), keepdims=True)
    xn = (xg * pooled).sum(axis=1, keepdims=True)
    t = xn.reshape(b * groups, -1)
    t = t - t.mean(axis=1, keepdims=True)
    std = t.std(axis=1, keepdims=True, ddof=1) + 1e-5   # torch default: unbiased
    t = t / std
    t = t.reshape(b, groups, h, w)
    t = t * weight.reshape(1, groups, 1, 1) + bias.reshape(1, groups, 1, 1)
    t = t.reshape(b * groups, 1, h, w)
    xg = xg * (1.0 / (1.0 + np.exp(-t)))
    return xg.reshape(b, c, h, w)


def _np_forward(x, p, groups):
    out = np.maximum(_np_bn(_np_conv1x1(x, p["w1"]), p["bn1_g"], p["bn1_b"],
                            p["bn1_m"], p["bn1_v"]), 0.0)
    out = np.maximum(_np_bn(_np_conv3x3(out, p["w2"]), p["bn2_g"], p["bn2_b"],
                            p["bn2_m"], p["bn2_v"]), 0.0)
    out = _np_bn(_np_conv1x1(out, p["w3"]), p["bn3_g"], p["bn3_b"],
                 p["bn3_m"], p["bn3_v"])
    out = _np_sge(out, p["sge_w"], p["sge_b"], groups)
    out = out + x                           # downsample is None
    return np.maximum(out, 0.0)


# ----------------------------------- test ------------------------------------


if __name__ == "__main__":
    batch, inplanes, planes, H, W = 2, 64, 16, 16, 16
    expansion, groups = 4, 16
    cout = planes * expansion               # 64 == inplanes -> downsample=None

    key = jax.random.PRNGKey(0)
    ks = jax.random.split(key, 18)

    def normal(k, shape, std):
        return jax.random.normal(k, shape, dtype=jnp.float32) * std

    params = {
        "w1": normal(ks[0], (planes, inplanes, 1, 1), math.sqrt(2.0 / inplanes)),
        "w2": normal(ks[1], (planes, planes, 3, 3), math.sqrt(2.0 / (planes * 9))),
        "w3": normal(ks[2], (cout, planes, 1, 1), math.sqrt(2.0 / planes)),
        "bn1_g": 1.0 + 0.2 * jax.random.normal(ks[3], (planes,), dtype=jnp.float32),
        "bn1_b": 0.1 * jax.random.normal(ks[4], (planes,), dtype=jnp.float32),
        "bn1_m": 0.1 * jax.random.normal(ks[5], (planes,), dtype=jnp.float32),
        "bn1_v": 0.8 + 0.4 * jax.random.uniform(ks[6], (planes,), dtype=jnp.float32),
        "bn2_g": 1.0 + 0.2 * jax.random.normal(ks[7], (planes,), dtype=jnp.float32),
        "bn2_b": 0.1 * jax.random.normal(ks[8], (planes,), dtype=jnp.float32),
        "bn2_m": 0.1 * jax.random.normal(ks[9], (planes,), dtype=jnp.float32),
        "bn2_v": 0.8 + 0.4 * jax.random.uniform(ks[10], (planes,), dtype=jnp.float32),
        "bn3_g": 1.0 + 0.2 * jax.random.normal(ks[11], (cout,), dtype=jnp.float32),
        "bn3_b": 0.1 * jax.random.normal(ks[12], (cout,), dtype=jnp.float32),
        "bn3_m": 0.1 * jax.random.normal(ks[13], (cout,), dtype=jnp.float32),
        "bn3_v": 0.8 + 0.4 * jax.random.uniform(ks[14], (cout,), dtype=jnp.float32),
        # Module inits these to 0 / 1; randomize so the normalization/gating math
        # is actually exercised by the test.
        "sge_w": 0.5 * jax.random.normal(ks[15], (1, groups, 1, 1), dtype=jnp.float32),
        "sge_b": 1.0 + 0.5 * jax.random.normal(ks[16], (1, groups, 1, 1), dtype=jnp.float32),
    }
    x = jax.random.normal(ks[17], (batch, inplanes, H, W), dtype=jnp.float32)

    out = bottleneck_forward(x, params, groups=groups)
    out = jax.block_until_ready(out)

    ref = _np_forward(np.asarray(x, np.float64),
                      {k: np.asarray(v, np.float64) for k, v in params.items()},
                      groups=groups)
    # Tolerance accounts for bf16 MXU operands (f32 accumulation) vs. the f64
    # reference across the three stacked convolutions.
    np.testing.assert_allclose(np.asarray(out), ref, rtol=5e-2, atol=1e-1)

    print("KERNEL_OK")
</pallas_src>

<mosaic_0001>
module attributes {stable_mosaic.version = 11 : i64} {
  func.func @_bottleneck_sge_kernel(%arg0: i32, %arg1: memref<1x64x256xf32, #tpu.memory_space<vmem>>, %arg2: memref<9x1x256xf32, #tpu.memory_space<vmem>>, %arg3: memref<16x64xbf16, #tpu.memory_space<vmem>>, %arg4: memref<16x1xf32, #tpu.memory_space<vmem>>, %arg5: memref<16x144xbf16, #tpu.memory_space<vmem>>, %arg6: memref<16x1xf32, #tpu.memory_space<vmem>>, %arg7: memref<64x16xbf16, #tpu.memory_space<vmem>>, %arg8: memref<64x1xf32, #tpu.memory_space<vmem>>, %arg9: memref<16x64xf32, #tpu.memory_space<vmem>>, %arg10: memref<64x16xf32, #tpu.memory_space<vmem>>, %arg11: memref<16x1xf32, #tpu.memory_space<vmem>>, %arg12: memref<16x1xf32, #tpu.memory_space<vmem>>, %arg13: memref<1x64x256xf32, #tpu.memory_space<vmem>>) attributes {dimension_semantics = [#tpu.dimension_semantics<parallel>], iteration_bounds = array<i64: 2>, scalar_prefetch = 0 : i64, scratch_operands = 0 : i64, tpu.core_type = #tpu.core_type<tc>, window_params = [{transform_indices = @transform_0, window_bounds = array<i64: 1, 64, 256>}, {pipeline_mode = #tpu.pipeline_mode<synchronous>, transform_indices = @transform_1, window_bounds = array<i64: 9, 1, 256>}, {pipeline_mode = #tpu.pipeline_mode<synchronous>, transform_indices = @transform_2, window_bounds = array<i64: 16, 64>}, {pipeline_mode = #tpu.pipeline_mode<synchronous>, transform_indices = @transform_3, window_bounds = array<i64: 16, 1>}, {pipeline_mode = #tpu.pipeline_mode<synchronous>, transform_indices = @transform_4, window_bounds = array<i64: 16, 144>}, {pipeline_mode = #tpu.pipeline_mode<synchronous>, transform_indices = @transform_5, window_bounds = array<i64: 16, 1>}, {pipeline_mode = #tpu.pipeline_mode<synchronous>, transform_indices = @transform_6, window_bounds = array<i64: 64, 16>}, {pipeline_mode = #tpu.pipeline_mode<synchronous>, transform_indices = @transform_7, window_bounds = array<i64: 64, 1>}, {pipeline_mode = #tpu.pipeline_mode<synchronous>, transform_indices = @transform_8, window_bounds = array<i64: 16, 64>}, {pipeline_mode = #tpu.pipeline_mode<synchronous>, transform_indices = @transform_9, window_bounds = array<i64: 64, 16>}, {pipeline_mode = #tpu.pipeline_mode<synchronous>, transform_indices = @transform_10, window_bounds = array<i64: 16, 1>}, {pipeline_mode = #tpu.pipeline_mode<synchronous>, transform_indices = @transform_11, window_bounds = array<i64: 16, 1>}, {transform_indices = @transform_12, window_bounds = array<i64: 1, 64, 256>}]} {
    %c0 = arith.constant 0 : index
    %c0_0 = arith.constant 0 : index
    %c0_1 = arith.constant 0 : index
    %0 = vector.load %arg1[%c0, %c0_0, %c0_1] : memref<1x64x256xf32, #tpu.memory_space<vmem>>, vector<1x64x256xf32>
    %1 = vector.shape_cast %0 : vector<1x64x256xf32> to vector<64x256xf32>
    %c0_2 = arith.constant 0 : index
    %c0_3 = arith.constant 0 : index
    %2 = vector.load %arg3[%c0_2, %c0_3] : memref<16x64xbf16, #tpu.memory_space<vmem>>, vector<16x64xbf16>
    %3 = arith.truncf %1 : vector<64x256xf32> to vector<64x256xbf16>
    %cst = arith.constant dense<0.000000e+00> : vector<16x256xf32>
    %4 = tpu.matmul %2, %3, %cst {dimension_numbers = #tpu.dot_dimension_numbers<[1], [0], [0], [1], [0, 0, 1, 1], [], []>} : vector<16x64xbf16>, vector<64x256xbf16>, vector<16x256xf32> -> vector<16x256xf32>
    %c0_4 = arith.constant 0 : index
    %c0_5 = arith.constant 0 : index
    %5 = vector.load %arg4[%c0_4, %c0_5] : memref<16x1xf32, #tpu.memory_space<vmem>>, vector<16x1xf32>
    %6 = vector.broadcast %5 : vector<16x1xf32> to vector<16x256xf32>
    %7 = arith.addf %4, %6 : vector<16x256xf32>
    %cst_6 = arith.constant 0.000000e+00 : f32
    %8 = vector.broadcast %cst_6 : f32 to vector<16x256xf32>
    %9 = arith.maximumf %7, %8 : vector<16x256xf32>
    %10 = tpu.concatenate %9, %9 in 1 : vector<16x256xf32>, vector<16x256xf32> -> vector<16x512xf32>
    %11 = vector.extract_strided_slice %10 {offsets = [0, 239], sizes = [16, 256], strides = [1, 1]} : vector<16x512xf32> to vector<16x256xf32>
    %c0_7 = arith.constant 0 : index
    %c0_8 = arith.constant 0 : index
    %c0_9 = arith.constant 0 : index
    %12 = vector.load %arg2[%c0_7, %c0_8, %c0_9] : memref<9x1x256xf32, #tpu.memory_space<vmem>>, vector<1x1x256xf32>
    %13 = vector.shape_cast %12 : vector<1x1x256xf32> to vector<1x256xf32>
    %14 = vector.broadcast %13 : vector<1x256xf32> to vector<16x256xf32>
    %15 = arith.mulf %11, %14 : vector<16x256xf32>
    %16 = vector.extract_strided_slice %10 {offsets = [0, 240], sizes = [16, 256], strides = [1, 1]} : vector<16x512xf32> to vector<16x256xf32>
    %c1 = arith.constant 1 : index
    %c0_10 = arith.constant 0 : index
    %c0_11 = arith.constant 0 : index
    %17 = vector.load %arg2[%c1, %c0_10, %c0_11] : memref<9x1x256xf32, #tpu.memory_space<vmem>>, vector<1x1x256xf32>
    %18 = vector.shape_cast %17 : vector<1x1x256xf32> to vector<1x256xf32>
    %19 = vector.broadcast %18 : vector<1x256xf32> to vector<16x256xf32>
    %20 = arith.mulf %16, %19 : vector<16x256xf32>
    %21 = vector.extract_strided_slice %10 {offsets = [0, 241], sizes = [16, 256], strides = [1, 1]} : vector<16x512xf32> to vector<16x256xf32>
    %c2 = arith.constant 2 : index
    %c0_12 = arith.constant 0 : index
    %c0_13 = arith.constant 0 : index
    %22 = vector.load %arg2[%c2, %c0_12, %c0_13] : memref<9x1x256xf32, #tpu.memory_space<vmem>>, vector<1x1x256xf32>
    %23 = vector.shape_cast %22 : vector<1x1x256xf32> to vector<1x256xf32>
    %24 = vector.broadcast %23 : vector<1x256xf32> to vector<16x256xf32>
    %25 = arith.mulf %21, %24 : vector<16x256xf32>
    %26 = vector.extract_strided_slice %10 {offsets = [0, 255], sizes = [16, 256], strides = [1, 1]} : vector<16x512xf32> to vector<16x256xf32>
    %c3 = arith.constant 3 : index
    %c0_14 = arith.constant 0 : index
    %c0_15 = arith.constant 0 : index
    %27 = vector.load %arg2[%c3, %c0_14, %c0_15] : memref<9x1x256xf32, #tpu.memory_space<vmem>>, vector<1x1x256xf32>
    %28 = vector.shape_cast %27 : vector<1x1x256xf32> to vector<1x256xf32>
    %29 = vector.broadcast %28 : vector<1x256xf32> to vector<16x256xf32>
    %30 = arith.mulf %26, %29 : vector<16x256xf32>
    %31 = vector.extract_strided_slice %10 {offsets = [0, 1], sizes = [16, 256], strides = [1, 1]} : vector<16x512xf32> to vector<16x256xf32>
    %c5 = arith.constant 5 : index
    %c0_16 = arith.constant 0 : index
    %c0_17 = arith.constant 0 : index
    %32 = vector.load %arg2[%c5, %c0_16, %c0_17] : memref<9x1x256xf32, #tpu.memory_space<vmem>>, vector<1x1x256xf32>
    %33 = vector.shape_cast %32 : vector<1x1x256xf32> to vector<1x256xf32>
    %34 = vector.broadcast %33 : vector<1x256xf32> to vector<16x256xf32>
    %35 = arith.mulf %31, %34 : vector<16x256xf32>
    %36 = vector.extract_strided_slice %10 {offsets = [0, 15], sizes = [16, 256], strides = [1, 1]} : vector<16x512xf32> to vector<16x256xf32>
    %c6 = arith.constant 6 : index
    %c0_18 = arith.constant 0 : index
    %c0_19 = arith.constant 0 : index
    %37 = vector.load %arg2[%c6, %c0_18, %c0_19] : memref<9x1x256xf32, #tpu.memory_space<vmem>>, vector<1x1x256xf32>
    %38 = vector.shape_cast %37 : vector<1x1x256xf32> to vector<1x256xf32>
    %39 = vector.broadcast %38 : vector<1x256xf32> to vector<16x256xf32>
    %40 = arith.mulf %36, %39 : vector<16x256xf32>
    %41 = vector.extract_strided_slice %10 {offsets = [0, 16], sizes = [16, 256], strides = [1, 1]} : vector<16x512xf32> to vector<16x256xf32>
    %c7 = arith.constant 7 : index
    %c0_20 = arith.constant 0 : index
    %c0_21 = arith.constant 0 : index
    %42 = vector.load %arg2[%c7, %c0_20, %c0_21] : memref<9x1x256xf32, #tpu.memory_space<vmem>>, vector<1x1x256xf32>
    %43 = vector.shape_cast %42 : vector<1x1x256xf32> to vector<1x256xf32>
    %44 = vector.broadcast %43 : vector<1x256xf32> to vector<16x256xf32>
    %45 = arith.mulf %41, %44 : vector<16x256xf32>
    %46 = vector.extract_strided_slice %10 {offsets = [0, 17], sizes = [16, 256], strides = [1, 1]} : vector<16x512xf32> to vector<16x256xf32>
    %c8 = arith.constant 8 : index
    %c0_22 = arith.constant 0 : index
    %c0_23 = arith.constant 0 : index
    %47 = vector.load %arg2[%c8, %c0_22, %c0_23] : memref<9x1x256xf32, #tpu.memory_space<vmem>>, vector<1x1x256xf32>
    %48 = vector.shape_cast %47 : vector<1x1x256xf32> to vector<1x256xf32>
    %49 = vector.broadcast %48 : vector<1x256xf32> to vector<16x256xf32>
    %50 = arith.mulf %46, %49 : vector<16x256xf32>
    %51 = tpu.concatenate %15, %20, %25, %30, %9, %35, %40, %45, %50 in 0 : vector<16x256xf32>, vector<16x256xf32>, vector<16x256xf32>, vector<16x256xf32>, vector<16x256xf32>, vector<16x256xf32>, vector<16x256xf32>, vector<16x256xf32>, vector<16x256xf32> -> vector<144x256xf32>
    %52 = arith.truncf %51 : vector<144x256xf32> to vector<144x256xbf16>
    %c0_24 = arith.constant 0 : index
    %c0_25 = arith.constant 0 : index
    %53 = vector.load %arg5[%c0_24, %c0_25] : memref<16x144xbf16, #tpu.memory_space<vmem>>, vector<16x144xbf16>
    %cst_26 = arith.constant dense<0.000000e+00> : vector<16x256xf32>
    %54 = tpu.matmul %53, %52, %cst_26 {dimension_numbers = #tpu.dot_dimension_numbers<[1], [0], [0], [1], [0, 0, 1, 1], [], []>} : vector<16x144xbf16>, vector<144x256xbf16>, vector<16x256xf32> -> vector<16x256xf32>
    %c0_27 = arith.constant 0 : index
    %c0_28 = arith.constant 0 : index
    %55 = vector.load %arg6[%c0_27, %c0_28] : memref<16x1xf32, #tpu.memory_space<vmem>>, vector<16x1xf32>
    %56 = vector.broadcast %55 : vector<16x1xf32> to vector<16x256xf32>
    %57 = arith.addf %54, %56 : vector<16x256xf32>
    %cst_29 = arith.constant 0.000000e+00 : f32
    %58 = vector.broadcast %cst_29 : f32 to vector<16x256xf32>
    %59 = arith.maximumf %57, %58 : vector<16x256xf32>
    %c0_30 = arith.constant 0 : index
    %c0_31 = arith.constant 0 : index
    %60 = vector.load %arg7[%c0_30, %c0_31] : memref<64x16xbf16, #tpu.memory_space<vmem>>, vector<64x16xbf16>
    %61 = arith.truncf %59 : vector<16x256xf32> to vector<16x256xbf16>
    %cst_32 = arith.constant dense<0.000000e+00> : vector<64x256xf32>
    %62 = tpu.matmul %60, %61, %cst_32 {dimension_numbers = #tpu.dot_dimension_numbers<[1], [0], [0], [1], [0, 0, 1, 1], [], []>} : vector<64x16xbf16>, vector<16x256xbf16>, vector<64x256xf32> -> vector<64x256xf32>
    %c0_33 = arith.constant 0 : index
    %c0_34 = arith.constant 0 : index
    %63 = vector.load %arg8[%c0_33, %c0_34] : memref<64x1xf32, #tpu.memory_space<vmem>>, vector<64x1xf32>
    %64 = vector.broadcast %63 : vector<64x1xf32> to vector<64x256xf32>
    %65 = arith.addf %62, %64 : vector<64x256xf32>
    %cst_35 = arith.constant dense<0.000000e+00> : vector<64xf32>
    %66 = vector.multi_reduction <add>, %65, %cst_35 [1] : vector<64x256xf32> to vector<64xf32>
    %67 = vector.shape_cast %66 : vector<64xf32> to vector<64x1xf32>
    %cst_36 = arith.constant 2.560000e+02 : f32
    %68 = vector.broadcast %cst_36 : f32 to vector<64x1xf32>
    %69 = arith.divf %67, %68 : vector<64x1xf32>
    %c0_37 = arith.constant 0 : index
    %c0_38 = arith.constant 0 : index
    %70 = vector.load %arg9[%c0_37, %c0_38] : memref<16x64xf32, #tpu.memory_space<vmem>>, vector<16x64xf32>
    %71 = vector.broadcast %69 : vector<64x1xf32> to vector<64x256xf32>
    %72 = arith.mulf %65, %71 : vector<64x256xf32>
    %cst_39 = arith.constant dense<0.000000e+00> : vector<16x256xf32>
    %73 = tpu.matmul %70, %72, %cst_39 {dimension_numbers = #tpu.dot_dimension_numbers<[1], [0], [0], [1], [0, 0, 1, 1], [], []>} : vector<16x64xf32>, vector<64x256xf32>, vector<16x256xf32> -> vector<16x256xf32>
    %cst_40 = arith.constant dense<0.000000e+00> : vector<16xf32>
    %74 = vector.multi_reduction <add>, %73, %cst_40 [1] : vector<16x256xf32> to vector<16xf32>
    %75 = vector.shape_cast %74 : vector<16xf32> to vector<16x1xf32>
    %cst_41 = arith.constant 2.560000e+02 : f32
    %76 = vector.broadcast %cst_41 : f32 to vector<16x1xf32>
    %77 = arith.divf %75, %76 : vector<16x1xf32>
    %78 = vector.broadcast %77 : vector<16x1xf32> to vector<16x256xf32>
    %79 = arith.subf %73, %78 : vector<16x256xf32>
    %80 = arith.mulf %79, %79 : vector<16x256xf32>
    %cst_42 = arith.constant dense<0.000000e+00> : vector<16xf32>
    %81 = vector.multi_reduction <add>, %80, %cst_42 [1] : vector<16x256xf32> to vector<16xf32>
    %82 = vector.shape_cast %81 : vector<16xf32> to vector<16x1xf32>
    %cst_43 = arith.constant 2.550000e+02 : f32
    %83 = vector.broadcast %cst_43 : f32 to vector<16x1xf32>
    %84 = arith.divf %82, %83 : vector<16x1xf32>
    %85 = math.sqrt %84 : vector<16x1xf32>
    %cst_44 = arith.constant 9.99999974E-6 : f32
    %86 = vector.broadcast %cst_44 : f32 to vector<16x1xf32>
    %87 = arith.addf %85, %86 : vector<16x1xf32>
    %88 = vector.broadcast %87 : vector<16x1xf32> to vector<16x256xf32>
    %89 = arith.divf %79, %88 : vector<16x256xf32>
    %c0_45 = arith.constant 0 : index
    %c0_46 = arith.constant 0 : index
    %90 = vector.load %arg11[%c0_45, %c0_46] : memref<16x1xf32, #tpu.memory_space<vmem>>, vector<16x1xf32>
    %91 = vector.broadcast %90 : vector<16x1xf32> to vector<16x256xf32>
    %92 = arith.mulf %89, %91 : vector<16x256xf32>
    %c0_47 = arith.constant 0 : index
    %c0_48 = arith.constant 0 : index
    %93 = vector.load %arg12[%c0_47, %c0_48] : memref<16x1xf32, #tpu.memory_space<vmem>>, vector<16x1xf32>
    %94 = vector.broadcast %93 : vector<16x1xf32> to vector<16x256xf32>
    %95 = arith.addf %92, %94 : vector<16x256xf32>
    %cst_49 = arith.constant 0.000000e+00 : f32
    %96 = vector.broadcast %cst_49 : f32 to vector<16x256xf32>
    %97 = arith.subf %96, %95 : vector<16x256xf32>
    %98 = math.exp %97 : vector<16x256xf32>
    %cst_50 = arith.constant 1.000000e+00 : f32
    %99 = vector.broadcast %cst_50 : f32 to vector<16x256xf32>
    %100 = arith.addf %99, %98 : vector<16x256xf32>
    %101 = tpu.reciprocal %100 {approx = true} : vector<16x256xf32> -> vector<16x256xf32>
    %c0_51 = arith.constant 0 : index
    %c0_52 = arith.constant 0 : index
    %102 = vector.load %arg10[%c0_51, %c0_52] : memref<64x16xf32, #tpu.memory_space<vmem>>, vector<64x16xf32>
    %cst_53 = arith.constant dense<0.000000e+00> : vector<64x256xf32>
    %103 = tpu.matmul %102, %101, %cst_53 {dimension_numbers = #tpu.dot_dimension_numbers<[1], [0], [0], [1], [0, 0, 1, 1], [], []>} : vector<64x16xf32>, vector<16x256xf32>, vector<64x256xf32> -> vector<64x256xf32>
    %104 = arith.mulf %65, %103 : vector<64x256xf32>
    %105 = arith.addf %104, %1 : vector<64x256xf32>
    %cst_54 = arith.constant 0.000000e+00 : f32
    %106 = vector.broadcast %cst_54 : f32 to vector<64x256xf32>
    %107 = arith.maximumf %105, %106 : vector<64x256xf32>
    %c0_55 = arith.constant 0 : index
    %c0_56 = arith.constant 0 : index
    %c0_57 = arith.constant 0 : index
    %108 = vector.load %arg13[%c0_55, %c0_56, %c0_57] : memref<1x64x256xf32, #tpu.memory_space<vmem>>, vector<1x64x256xf32>
    %109 = vector.shape_cast %108 : vector<1x64x256xf32> to vector<64x256xf32>
    %110 = vector.shape_cast %107 : vector<64x256xf32> to vector<1x64x256xf32>
    tpu.vector_store %arg13[%c0_55, %c0_56, %c0_57], %110 {strides = array<i32>} : memref<1x64x256xf32, #tpu.memory_space<vmem>>, vector<1x64x256xf32>,
    return
  }
  func.func @transform_0(%arg0: i32) -> (i32, i32, i32) {
    %c0_i32 = arith.constant 0 : i32
    %c0_i32_0 = arith.constant 0 : i32
    %c0_i32_1 = arith.constant 0 : i32
    return %arg0, %c0_i32, %c0_i32_0 : i32, i32, i32
  }
  func.func @transform_1(%arg0: i32) -> (i32, i32, i32) {
    %c0_i32 = arith.constant 0 : i32
    %c0_i32_0 = arith.constant 0 : i32
    %c0_i32_1 = arith.constant 0 : i32
    %c0_i32_2 = arith.constant 0 : i32
    return %c0_i32, %c0_i32_0, %c0_i32_1 : i32, i32, i32
  }
  func.func @transform_2(%arg0: i32) -> (i32, i32) {
    %c0_i32 = arith.constant 0 : i32
    %c0_i32_0 = arith.constant 0 : i32
    %c0_i32_1 = arith.constant 0 : i32
    return %c0_i32, %c0_i32_0 : i32, i32
  }
  func.func @transform_3(%arg0: i32) -> (i32, i32) {
    %c0_i32 = arith.constant 0 : i32
    %c0_i32_0 = arith.constant 0 : i32
    %c0_i32_1 = arith.constant 0 : i32
    return %c0_i32, %c0_i32_0 : i32, i32
  }
  func.func @transform_4(%arg0: i32) -> (i32, i32) {
    %c0_i32 = arith.constant 0 : i32
    %c0_i32_0 = arith.constant 0 : i32
    %c0_i32_1 = arith.constant 0 : i32
    return %c0_i32, %c0_i32_0 : i32, i32
  }
  func.func @transform_5(%arg0: i32) -> (i32, i32) {
    %c0_i32 = arith.constant 0 : i32
    %c0_i32_0 = arith.constant 0 : i32
    %c0_i32_1 = arith.constant 0 : i32
    return %c0_i32, %c0_i32_0 : i32, i32
  }
  func.func @transform_6(%arg0: i32) -> (i32, i32) {
    %c0_i32 = arith.constant 0 : i32
    %c0_i32_0 = arith.constant 0 : i32
    %c0_i32_1 = arith.constant 0 : i32
    return %c0_i32, %c0_i32_0 : i32, i32
  }
  func.func @transform_7(%arg0: i32) -> (i32, i32) {
    %c0_i32 = arith.constant 0 : i32
    %c0_i32_0 = arith.constant 0 : i32
    %c0_i32_1 = arith.constant 0 : i32
    return %c0_i32, %c0_i32_0 : i32, i32
  }
  func.func @transform_8(%arg0: i32) -> (i32, i32) {
    %c0_i32 = arith.constant 0 : i32
    %c0_i32_0 = arith.constant 0 : i32
    %c0_i32_1 = arith.constant 0 : i32
    return %c0_i32, %c0_i32_0 : i32, i32
  }
  func.func @transform_9(%arg0: i32) -> (i32, i32) {
    %c0_i32 = arith.constant 0 : i32
    %c0_i32_0 = arith.constant 0 : i32
    %c0_i32_1 = arith.constant 0 : i32
    return %c0_i32, %c0_i32_0 : i32, i32
  }
  func.func @transform_10(%arg0: i32) -> (i32, i32) {
    %c0_i32 = arith.constant 0 : i32
    %c0_i32_0 = arith.constant 0 : i32
    %c0_i32_1 = arith.constant 0 : i32
    return %c0_i32, %c0_i32_0 : i32, i32
  }
  func.func @transform_11(%arg0: i32) -> (i32, i32) {
    %c0_i32 = arith.constant 0 : i32
    %c0_i32_0 = arith.constant 0 : i32
    %c0_i32_1 = arith.constant 0 : i32
    return %c0_i32, %c0_i32_0 : i32, i32
  }
  func.func @transform_12(%arg0: i32) -> (i32, i32, i32) {
    %c0_i32 = arith.constant 0 : i32
    %c0_i32_0 = arith.constant 0 : i32
    %c0_i32_1 = arith.constant 0 : i32
    return %arg0, %c0_i32, %c0_i32_0 : i32, i32, i32
  }
}

</mosaic_0001>

<llo_original>
// kernel: tpu_custom_call.1
$region0: #{tpu_custom_call.1}
  #allocation0 [shape = 'u32[]', space=smem, size = 0x4, offset = 0x4, fixed_abs, tag = 'smem constant byte address 0x4 - core index']
  #allocation1 [shape = 'u32[144,128]{1,0:T(1,128)}', space=vmem, size = 0x12000, scoped, tag = 'internal scratch']
  %s0 = inlined_call_operand.hbm [shape: f32[2,64,256], index: 0, kind: input, shape index: {}]
  %s1 = inlined_call_operand.vmem [shape: f32[9,1,256], index: 1, kind: input, shape index: {}]
  %s2 = inlined_call_operand.vmem [shape: bf16[16,64], index: 2, kind: input, shape index: {}]
  %s3 = inlined_call_operand.vmem [shape: f32[16,1], index: 3, kind: input, shape index: {}]
  %s4 = inlined_call_operand.vmem [shape: bf16[16,144], index: 4, kind: input, shape index: {}]
  %s5 = inlined_call_operand.vmem [shape: f32[16,1], index: 5, kind: input, shape index: {}]
  %s6 = inlined_call_operand.vmem [shape: bf16[64,16], index: 6, kind: input, shape index: {}]
  %s7 = inlined_call_operand.vmem [shape: f32[64,1], index: 7, kind: input, shape index: {}]
  %s8 = inlined_call_operand.vmem [shape: f32[16,64], index: 8, kind: input, shape index: {}]
  %s9 = inlined_call_operand.vmem [shape: f32[64,16], index: 9, kind: input, shape index: {}]
  %s10 = inlined_call_operand.vmem [shape: f32[16,1], index: 10, kind: input, shape index: {}]
  %s11 = inlined_call_operand.vmem [shape: f32[16,1], index: 11, kind: input, shape index: {}]
  %s12 = inlined_call_operand.hbm [shape: f32[2,64,256], index: 12, kind: output, shape index: {}]
  %s13 = sld [smem:[#allocation0]]
  $region85: #{tpu_custom_call.1} parent=0
    _
  %s15 = ssub.s32 1, %s13
  %s16 = scalar_select 0, %s15, %s13
  $region1: #{tpu_custom_call.1} parent=0
    #allocation2 [shape = 'u8[131072]{0}', space=vmem, size = 0x20000, scoped, tag = 'input window, operand 0']
    #allocation3 [shape = 's32[2]{0}', space=sflag, size = 0x8, scoped, tag = 'scoped memory for tpu_custom_call.1']
    #allocation4 [shape = 's32[2]{0}', space=sflag, size = 0x8, scoped, tag = 'scoped memory for tpu_custom_call.1']
    #allocation5 [shape = 'u8[131072]{0}', space=vmem, size = 0x20000, scoped, tag = 'output window, operand 0']
    %17 = vsyncpa [#allocation3], 0
    %s18 = scalar_lea.sflag [#allocation3], 1
    %19 = vsyncpa %s18, 0
    %20 = vsyncpa [#allocation4], 0
    %s21 = scalar_lea.sflag [#allocation4], 1
    %22 = vsyncpa %s21, 0
    loop: start=0, step=1, limit=4
    $region2: #{tpu_custom_call.1} parent=1 // loop_pre_header
      _
    $region3: #{tpu_custom_call.1} parent=1 // loop_header
      %s24 = sphi 0, %s28
      %p25 = scmp.ge.s32.totalorder %s24, 4
      %s34 = sphi 0, %s36
      %s37 = sphi 0, %s34
      %s38 = sphi 0, %s37
      %s54 = sphi 0, %s38
      %s58 = sphi 0, %s58
      %s60 = sphi 0, %s58
      %s61 = sphi 0, %s60
      %s75 = sphi 0, %s61
      %s79 = sphi 0, %s79
      %s81 = sphi 0, %s79
      %s82 = sphi 0, %s81
      %s96 = sphi 0, %s82
      %s100 = sphi 0, %s100
      %s102 = sphi 0, %s100
      %s103 = sphi 0, %s102
      %s117 = sphi 0, %s103
      %s121 = sphi 0, %s121
      %s123 = sphi 0, %s121
      %s124 = sphi 0, %s123
      %s138 = sphi 0, %s124
      %s142 = sphi 0, %s142
      %s144 = sphi 0, %s142
      %s145 = sphi 0, %s144
      %s159 = sphi 0, %s145
      %s163 = sphi 0, %s163
      %s165 = sphi 0, %s163
      %s166 = sphi 0, %s165
      %s180 = sphi 0, %s166
      %s184 = sphi 0, %s184
      %s186 = sphi 0, %s184
      %s187 = sphi 0, %s186
      %s201 = sphi 0, %s187
      %s205 = sphi 0, %s205
      %s207 = sphi 0, %s205
      %s208 = sphi 0, %s207
      %s222 = sphi 0, %s208
      %s226 = sphi 0, %s226
      %s228 = sphi 0, %s226
      %s229 = sphi 0, %s228
      %s243 = sphi 0, %s229
      %s247 = sphi 0, %s247
      %s249 = sphi 0, %s247
      %s250 = sphi 0, %s249
      %s264 = sphi 0, %s250
      %s268 = sphi 0, %s268
      %s270 = sphi 0, %s268
      %s271 = sphi 0, %s270
      %s285 = sphi 0, %s271
      %s291 = sphi 0, %s293
      %s294 = sphi 0, %s291
      %s295 = sphi 0, %s294
      %s311 = sphi 0, %s295
    $region4: #{tpu_custom_call.1} parent=1 // loop_header_branch
      %27 = sbr.rel (%p25) target = $region8
    $region5: #{tpu_custom_call.1} parent=1 // loop_body
      %s29 = ssub.s32 %s24, 1
      %s30 = ssub.s32 %s24, 2
      %s31 = sadd.s32 %s24, 1
      %s32 = ssub.s32 %s24, %s31
      %p33 = scmp.eq.s32.totalorder %s32, 0
      %s35 = sadd.s32 %s34, 1
      %s36 = scalar_select %p33, %s34, %s35
      %p39 = pneg %p33
      %p40 = scmp.eq.s32.totalorder %s24, 1
      %p41 = por %p39, %p40
      %p42 = scmp.ne.s32.totalorder %s34, %s37
      %p43 = scmp.eq.s32.totalorder %s24, 0
      %p44 = por %p42, %p43
      %p45 = scmp.ne.s32.totalorder %s34, %s37
      %p46 = scmp.eq.s32.totalorder %s29, 1
      %p47 = por %p45, %p46
      %p48 = scmp.ne.s32.totalorder %s37, %s38
      %p49 = scmp.eq.s32.totalorder %s29, 0
      %p50 = por %p48, %p49
      %p51 = scmp.ne.s32.totalorder %s37, %s38
      %p52 = scmp.eq.s32.totalorder %s30, 1
      %p53 = por %p51, %p52
      %p55 = scmp.ne.s32.totalorder %s38, %s54
      %p56 = scmp.eq.s32.totalorder %s30, 0
      %p57 = por %p55, %p56
      %s59 = sadd.s32 %s58, 1
      %p62 = scmp.eq.s32.totalorder %s24, 1
      %p63 = scmp.ne.s32.totalorder %s58, %s60
      %p64 = scmp.eq.s32.totalorder %s24, 0
      %p65 = por %p63, %p64
      %p66 = scmp.ne.s32.totalorder %s58, %s60
      %p67 = scmp.eq.s32.totalorder %s29, 1
      %p68 = por %p66, %p67
      %p69 = scmp.ne.s32.totalorder %s60, %s61
      %p70 = scmp.eq.s32.totalorder %s29, 0
      %p71 = por %p69, %p70
      %p72 = scmp.ne.s32.totalorder %s60, %s61
      %p73 = scmp.eq.s32.totalorder %s30, 1
      %p74 = por %p72, %p73
      %p76 = scmp.ne.s32.totalorder %s61, %s75
      %p77 = scmp.eq.s32.totalorder %s30, 0
      %p78 = por %p76, %p77
      %s80 = sadd.s32 %s79, 1
      %p83 = scmp.eq.s32.totalorder %s24, 1
      %p84 = scmp.ne.s32.totalorder %s79, %s81
      %p85 = scmp.eq.s32.totalorder %s24, 0
      %p86 = por %p84, %p85
      %p87 = scmp.ne.s32.totalorder %s79, %s81
      %p88 = scmp.eq.s32.totalorder %s29, 1
      %p89 = por %p87, %p88
      %p90 = scmp.ne.s32.totalorder %s81, %s82
      %p91 = scmp.eq.s32.totalorder %s29, 0
      %p92 = por %p90, %p91
      %p93 = scmp.ne.s32.totalorder %s81, %s82
      %p94 = scmp.eq.s32.totalorder %s30, 1
      %p95 = por %p93, %p94
      %p97 = scmp.ne.s32.totalorder %s82, %s96
      %p98 = scmp.eq.s32.totalorder %s30, 0
      %p99 = por %p97, %p98
      %s101 = sadd.s32 %s100, 1
      %p104 = scmp.eq.s32.totalorder %s24, 1
      %p105 = scmp.ne.s32.totalorder %s100, %s102
      %p106 = scmp.eq.s32.totalorder %s24, 0
      %p107 = por %p105, %p106
      %p108 = scmp.ne.s32.totalorder %s100, %s102
      %p109 = scmp.eq.s32.totalorder %s29, 1
      %p110 = por %p108, %p109
      %p111 = scmp.ne.s32.totalorder %s102, %s103
      %p112 = scmp.eq.s32.totalorder %s29, 0
      %p113 = por %p111, %p112
      %p114 = scmp.ne.s32.totalorder %s102, %s103
      %p115 = scmp.eq.s32.totalorder %s30, 1
      %p116 = por %p114, %p115
      %p118 = scmp.ne.s32.totalorder %s103, %s117
      %p119 = scmp.eq.s32.totalorder %s30, 0
      %p120 = por %p118, %p119
      %s122 = sadd.s32 %s121, 1
      %p125 = scmp.eq.s32.totalorder %s24, 1
      %p126 = scmp.ne.s32.totalorder %s121, %s123
      %p127 = scmp.eq.s32.totalorder %s24, 0
      %p128 = por %p126, %p127
      %p129 = scmp.ne.s32.totalorder %s121, %s123
      %p130 = scmp.eq.s32.totalorder %s29, 1
      %p131 = por %p129, %p130
      %p132 = scmp.ne.s32.totalorder %s123, %s124
      %p133 = scmp.eq.s32.totalorder %s29, 0
      %p134 = por %p132, %p133
      %p135 = scmp.ne.s32.totalorder %s123, %s124
      %p136 = scmp.eq.s32.totalorder %s30, 1
      %p137 = por %p135, %p136
      %p139 = scmp.ne.s32.totalorder %s124, %s138
      %p140 = scmp.eq.s32.totalorder %s30, 0
      %p141 = por %p139, %p140
      %s143 = sadd.s32 %s142, 1
      %p146 = scmp.eq.s32.totalorder %s24, 1
      %p147 = scmp.ne.s32.totalorder %s142, %s144
      %p148 = scmp.eq.s32.totalorder %s24, 0
      %p149 = por %p147, %p148
      %p150 = scmp.ne.s32.totalorder %s142, %s144
      %p151 = scmp.eq.s32.totalorder %s29, 1
      %p152 = por %p150, %p151
      %p153 = scmp.ne.s32.totalorder %s144, %s145
      %p154 = scmp.eq.s32.totalorder %s29, 0
      %p155 = por %p153, %p154
      %p156 = scmp.ne.s32.totalorder %s144, %s145
      %p157 = scmp.eq.s32.totalorder %s30, 1
      %p158 = por %p156, %p157
      %p160 = scmp.ne.s32.totalorder %s145, %s159
      %p161 = scmp.eq.s32.totalorder %s30, 0
      %p162 = por %p160, %p161
      %s164 = sadd.s32 %s163, 1
      %p167 = scmp.eq.s32.totalorder %s24, 1
      %p168 = scmp.ne.s32.totalorder %s163, %s165
      %p169 = scmp.eq.s32.totalorder %s24, 0
      %p170 = por %p168, %p169
      %p171 = scmp.ne.s32.totalorder %s163, %s165
      %p172 = scmp.eq.s32.totalorder %s29, 1
      %p173 = por %p171, %p172
      %p174 = scmp.ne.s32.totalorder %s165, %s166
      %p175 = scmp.eq.s32.totalorder %s29, 0
      %p176 = por %p174, %p175
      %p177 = scmp.ne.s32.totalorder %s165, %s166
      %p178 = scmp.eq.s32.totalorder %s30, 1
      %p179 = por %p177, %p178
      %p181 = scmp.ne.s32.totalorder %s166, %s180
      %p182 = scmp.eq.s32.totalorder %s30, 0
      %p183 = por %p181, %p182
      %s185 = sadd.s32 %s184, 1
      %p188 = scmp.eq.s32.totalorder %s24, 1
      %p189 = scmp.ne.s32.totalorder %s184, %s186
      %p190 = scmp.eq.s32.totalorder %s24, 0
      %p191 = por %p189, %p190
      %p192 = scmp.ne.s32.totalorder %s184, %s186
      %p193 = scmp.eq.s32.totalorder %s29, 1
      %p194 = por %p192, %p193
      %p195 = scmp.ne.s32.totalorder %s186, %s187
      %p196 = scmp.eq.s32.totalorder %s29, 0
      %p197 = por %p195, %p196
      %p198 = scmp.ne.s32.totalorder %s186, %s187
      %p199 = scmp.eq.s32.totalorder %s30, 1
      %p200 = por %p198, %p199
      %p202 = scmp.ne.s32.totalorder %s187, %s201
      %p203 = scmp.eq.s32.totalorder %s30, 0
      %p204 = por %p202, %p203
      %s206 = sadd.s32 %s205, 1
      %p209 = scmp.eq.s32.totalorder %s24, 1
      %p210 = scmp.ne.s32.totalorder %s205, %s207
      %p211 = scmp.eq.s32.totalorder %s24, 0
      %p212 = por %p210, %p211
      %p213 = scmp.ne.s32.totalorder %s205, %s207
      %p214 = scmp.eq.s32.totalorder %s29, 1
      %p215 = por %p213, %p214
      %p216 = scmp.ne.s32.totalorder %s207, %s208
      %p217 = scmp.eq.s32.totalorder %s29, 0
      %p218 = por %p216, %p217
      %p219 = scmp.ne.s32.totalorder %s207, %s208
      %p220 = scmp.eq.s32.totalorder %s30, 1
      %p221 = por %p219, %p220
      %p223 = scmp.ne.s32.totalorder %s208, %s222
      %p224 = scmp.eq.s32.totalorder %s30, 0
      %p225 = por %p223, %p224
      %s227 = sadd.s32 %s226, 1
      %p230 = scmp.eq.s32.totalorder %s24, 1
      %p231 = scmp.ne.s32.totalorder %s226, %s228
      %p232 = scmp.eq.s32.totalorder %s24, 0
      %p233 = por %p231, %p232
      %p234 = scmp.ne.s32.totalorder %s226, %s228
      %p235 = scmp.eq.s32.totalorder %s29, 1
      %p236 = por %p234, %p235
      %p237 = scmp.ne.s32.totalorder %s228, %s229
      %p238 = scmp.eq.s32.totalorder %s29, 0
      %p239 = por %p237, %p238
      %p240 = scmp.ne.s32.totalorder %s228, %s229
      %p241 = scmp.eq.s32.totalorder %s30, 1
      %p242 = por %p240, %p241
      %p244 = scmp.ne.s32.totalorder %s229, %s243
      %p245 = scmp.eq.s32.totalorder %s30, 0
      %p246 = por %p244, %p245
      %s248 = sadd.s32 %s247, 1
      %p251 = scmp.eq.s32.totalorder %s24, 1
      %p252 = scmp.ne.s32.totalorder %s247, %s249
      %p253 = scmp.eq.s32.totalorder %s24, 0
      %p254 = por %p252, %p253
      %p255 = scmp.ne.s32.totalorder %s247, %s249
      %p256 = scmp.eq.s32.totalorder %s29, 1
      %p257 = por %p255, %p256
      %p258 = scmp.ne.s32.totalorder %s249, %s250
      %p259 = scmp.eq.s32.totalorder %s29, 0
      %p260 = por %p258, %p259
      %p261 = scmp.ne.s32.totalorder %s249, %s250
      %p262 = scmp.eq.s32.totalorder %s30, 1
      %p263 = por %p261, %p262
      %p265 = scmp.ne.s32.totalorder %s250, %s264
      %p266 = scmp.eq.s32.totalorder %s30, 0
      %p267 = por %p265, %p266
      %s269 = sadd.s32 %s268, 1
      %p272 = scmp.eq.s32.totalorder %s24, 1
      %p273 = scmp.ne.s32.totalorder %s268, %s270
      %p274 = scmp.eq.s32.totalorder %s24, 0
      %p275 = por %p273, %p274
      %p276 = scmp.ne.s32.totalorder %s268, %s270
      %p277 = scmp.eq.s32.totalorder %s29, 1
      %p278 = por %p276, %p277
      %p279 = scmp.ne.s32.totalorder %s270, %s271
      %p280 = scmp.eq.s32.totalorder %s29, 0
      %p281 = por %p279, %p280
      %p282 = scmp.ne.s32.totalorder %s270, %s271
      %p283 = scmp.eq.s32.totalorder %s30, 1
      %p284 = por %p282, %p283
      %p286 = scmp.ne.s32.totalorder %s271, %s285
      %p287 = scmp.eq.s32.totalorder %s30, 0
      %p288 = por %p286, %p287
      %s289 = ssub.s32 %s24, %s31
      %p290 = scmp.eq.s32.totalorder %s289, 0
      %s292 = sadd.s32 %s291, 1
      %s293 = scalar_select %p290, %s291, %s292
      %p296 = pneg %p290
      %p297 = scmp.eq.s32.totalorder %s24, 1
      %p298 = por %p296, %p297
      %p299 = scmp.ne.s32.totalorder %s291, %s294
      %p300 = scmp.eq.s32.totalorder %s24, 0
      %p301 = por %p299, %p300
      %p302 = scmp.ne.s32.totalorder %s291, %s294
      %p303 = scmp.eq.s32.totalorder %s29, 1
      %p304 = por %p302, %p303
      %p305 = scmp.ne.s32.totalorder %s294, %s295
      %p306 = scmp.eq.s32.totalorder %s29, 0
      %p307 = por %p305, %p306
      %p308 = scmp.ne.s32.totalorder %s294, %s295
      %p309 = scmp.eq.s32.totalorder %s30, 1
      %p310 = por %p308, %p309
      %p312 = scmp.ne.s32.totalorder %s295, %s311
      %p313 = scmp.eq.s32.totalorder %s30, 0
      %p314 = por %p312, %p313
      %p315 = scmp.le.s32.totalorder 1, %s24
      %p316 = scmp.lt.s32.totalorder %s24, 3
      %p317 = pnand %p315, %p316
      %p318 = pneg %p317
      // Predicated region
      $region9: #{tpu_custom_call.1} parent=5 // pred_check
        _
      $region10: #{tpu_custom_call.1} parent=5 // pred_check_branch
        %320 = sbr.rel (%p317) target = $region12
      $region11: #{tpu_custom_call.1} parent=5 // pred_region
        %s321 = ssub.s32 %s24, 1
        // Predicated region
        $region13: #{tpu_custom_call.1} parent=11 // pred_check
          %p322 = pneg %p71
        $region14: #{tpu_custom_call.1} parent=11 // pred_check_branch
          %324 = sbr.rel (%p322) target = $region16
        $region15: #{tpu_custom_call.1} parent=11 // pred_region
          _
        $region16: #{tpu_custom_call.1} parent=11 // pred_fallthru
          _
        // Predicated region
        $region17: #{tpu_custom_call.1} parent=11 // pred_check
          %p325 = pneg %p92
        $region18: #{tpu_custom_call.1} parent=11 // pred_check_branch
          %327 = sbr.rel (%p325) target = $region20
        $region19: #{tpu_custom_call.1} parent=11 // pred_region
          _
        $region20: #{tpu_custom_call.1} parent=11 // pred_fallthru
          _
        // Predicated region
        $region21: #{tpu_custom_call.1} parent=11 // pred_check
          %p328 = pneg %p113
        $region22: #{tpu_custom_call.1} parent=11 // pred_check_branch
          %330 = sbr.rel (%p328) target = $region24
        $region23: #{tpu_custom_call.1} parent=11 // pred_region
          _
        $region24: #{tpu_custom_call.1} parent=11 // pred_fallthru
          _
        // Predicated region
        $region25: #{tpu_custom_call.1} parent=11 // pred_check
          %p331 = pneg %p134
        $region26: #{tpu_custom_call.1} parent=11 // pred_check_branch
          %333 = sbr.rel (%p331) target = $region28
        $region27: #{tpu_custom_call.1} parent=11 // pred_region
          _
        $region28: #{tpu_custom_call.1} parent=11 // pred_fallthru
          _
        // Predicated region
        $region29: #{tpu_custom_call.1} parent=11 // pred_check
          %p334 = pneg %p155
        $region30: #{tpu_custom_call.1} parent=11 // pred_check_branch
          %336 = sbr.rel (%p334) target = $region32
        $region31: #{tpu_custom_call.1} parent=11 // pred_region
          _
        $region32: #{tpu_custom_call.1} parent=11 // pred_fallthru
          _
        // Predicated region
        $region33: #{tpu_custom_call.1} parent=11 // pred_check
          %p337 = pneg %p176
        $region34: #{tpu_custom_call.1} parent=11 // pred_check_branch
          %339 = sbr.rel (%p337) target = $region36
        $region35: #{tpu_custom_call.1} parent=11 // pred_region
          _
        $region36: #{tpu_custom_call.1} parent=11 // pred_fallthru
          _
        // Predicated region
        $region37: #{tpu_custom_call.1} parent=11 // pred_check
          %p340 = pneg %p197
        $region38: #{tpu_custom_call.1} parent=11 // pred_check_branch
          %342 = sbr.rel (%p340) target = $region40
        $region39: #{tpu_custom_call.1} parent=11 // pred_region
          _
        $region40: #{tpu_custom_call.1} parent=11 // pred_fallthru
          _
        // Predicated region
        $region41: #{tpu_custom_call.1} parent=11 // pred_check
          %p343 = pneg %p218
        $region42: #{tpu_custom_call.1} parent=11 // pred_check_branch
          %345 = sbr.rel (%p343) target = $region44
        $region43: #{tpu_custom_call.1} parent=11 // pred_region
          _
        $region44: #{tpu_custom_call.1} parent=11 // pred_fallthru
          _
        // Predicated region
        $region45: #{tpu_custom_call.1} parent=11 // pred_check
          %p346 = pneg %p239
        $region46: #{tpu_custom_call.1} parent=11 // pred_check_branch
          %348 = sbr.rel (%p346) target = $region48
        $region47: #{tpu_custom_call.1} parent=11 // pred_region
          _
        $region48: #{tpu_custom_call.1} parent=11 // pred_fallthru
          _
        // Predicated region
        $region49: #{tpu_custom_call.1} parent=11 // pred_check
          %p349 = pneg %p260
        $region50: #{tpu_custom_call.1} parent=11 // pred_check_branch
          %351 = sbr.rel (%p349) target = $region52
        $region51: #{tpu_custom_call.1} parent=11 // pred_region
          _
        $region52: #{tpu_custom_call.1} parent=11 // pred_fallthru
          _
        // Predicated region
        $region53: #{tpu_custom_call.1} parent=11 // pred_check
          %p352 = pneg %p281
        $region54: #{tpu_custom_call.1} parent=11 // pred_check_branch
          %354 = sbr.rel (%p352) target = $region56
        $region55: #{tpu_custom_call.1} parent=11 // pred_region
          _
        $region56: #{tpu_custom_call.1} parent=11 // pred_fallthru
          _
      $region12: #{tpu_custom_call.1} parent=5 // pred_fallthru
        _
      %p355 = scmp.lt.s32.totalorder %s24, 2
      // Predicated region
      $region57: #{tpu_custom_call.1} parent=5 // pred_check
        %p356 = pneg %p355
      $region58: #{tpu_custom_call.1} parent=5 // pred_check_branch
        %358 = sbr.rel (%p356) target = $region60
      $region59: #{tpu_custom_call.1} parent=5 // pred_region
        // Predicated region
        $region61: #{tpu_custom_call.1} parent=59 // pred_check
          %p359 = pneg %p44
        $region62: #{tpu_custom_call.1} parent=59 // pred_check_branch
          %361 = sbr.rel (%p359) target = $region64
        $region63: #{tpu_custom_call.1} parent=59 // pred_region
          %s362 = sand.u32 %s34, 1
          %s363 = scalar_lea.sflag [#allocation3], %s362
          %s364 = sand.u32 %s34, 1
          %s365 = smul.addr %s364, 128
          %s366 = scalar_lea.vmem [#allocation2], %s365
          %s368 = ssub.s32 2048, 2048
          %369 = vsyncadd %s363, %s368
          %s370 = smul.addr %s24, 16
          %s371 = smul.addr %s370, 128
          %s372 = scalar_lea.hbm %s0, %s371
          %s373 = sshll.u32 %s366, 4
          %s374 = int_to_ptr.vmem [resolvable:$true] %s373
          %379 = dma.hbm_to_vmem [thread:$0]  %s372, 2048, %s374, %s363, 256, 256, 16
        $region64: #{tpu_custom_call.1} parent=59 // pred_fallthru
          _
      $region60: #{tpu_custom_call.1} parent=5 // pred_fallthru
        _
      %p380 = scmp.le.s32.totalorder 1, %s24
      %p381 = scmp.lt.s32.totalorder %s24, 3
      %p382 = pnand %p380, %p381
      %p383 = pneg %p382
      // Predicated region
      $region65: #{tpu_custom_call.1} parent=5 // pred_check
        _
      $region66: #{tpu_custom_call.1} parent=5 // pred_check_branch
        %385 = sbr.rel (%p382) target = $region68
      $region67: #{tpu_custom_call.1} parent=5 // pred_region
        %s386 = ssub.s32 %s24, 1
        %s387 = sand.u32 %s37, 1
        %s388 = scalar_lea.sflag [#allocation3], %s387
        %s389 = sand.u32 %s37, 1
        %s390 = smul.addr %s389, 128
        %s391 = scalar_lea.vmem [#allocation2], %s390
        // Predicated region
        $region69: #{tpu_custom_call.1} parent=67 // pred_check
          %p392 = pneg %p50
        $region70: #{tpu_custom_call.1} parent=67 // pred_check_branch
          %394 = sbr.rel (%p392) target = $region72
        $region71: #{tpu_custom_call.1} parent=67 // pred_region
          %395 = dma.done %s388, 2048
        $region72: #{tpu_custom_call.1} parent=67 // pred_fallthru
          _
        %s396 = sand.u32 %s37, 1
        %s397 = scalar_lea.sflag [#allocation3], %s396
        %s398 = sand.u32 %s37, 1
        %s399 = smul.addr %s398, 128
        %s400 = scalar_lea.vmem [#allocation2], %s399
        %p401 = pneg %p50
        %p402 = pneg %p47
        %p403 = pneg %p71
        %p404 = pneg %p68
        %p405 = pneg %p92
        %p406 = pneg %p89
        %p407 = pneg %p113
        %p408 = pneg %p110
        %p409 = pneg %p134
        %p410 = pneg %p131
        %p411 = pneg %p155
        %p412 = pneg %p152
        %p413 = pneg %p176
        %p414 = pneg %p173
        %p415 = pneg %p197
        %p416 = pneg %p194
        %p417 = pneg %p218
        %p418 = pneg %p215
        %p419 = pneg %p239
        %p420 = pneg %p236
        %p421 = pneg %p260
        %p422 = pneg %p257
        %p423 = pneg %p281
        %p424 = pneg %p278
        %p425 = pneg %p307
        %p426 = pneg %p304
        %s427 = sand.u32 %s294, 1
        %s428 = scalar_lea.sflag [#allocation4], %s427
        %s429 = sand.u32 %s294, 1
        %s430 = smul.addr %s429, 128
        %s431 = scalar_lea.vmem [#allocation5], %s430
        %v433 = vld [vmem:[%s391] sm:$0xff]
        %v434 = vld [vmem:[%s391 + $0x8] sm:$0xff]
        %v435 = vld [vmem:[%s391 + $0x10] sm:$0xff]
        %v436 = vld [vmem:[%s391 + $0x18] sm:$0xff]
        %v437 = vld [vmem:[%s391 + $0x20] sm:$0xff]
        %v438 = vld [vmem:[%s391 + $0x28] sm:$0xff]
        %v439 = vld [vmem:[%s391 + $0x30] sm:$0xff]
        %v440 = vld [vmem:[%s391 + $0x38] sm:$0xff]
        %v441 = vld [vmem:[%s391 + $0x40] sm:$0xff]
        %v442 = vld [vmem:[%s391 + $0x48] sm:$0xff]
        %v443 = vld [vmem:[%s391 + $0x50] sm:$0xff]
        %v444 = vld [vmem:[%s391 + $0x58] sm:$0xff]
        %v445 = vld [vmem:[%s391 + $0x60] sm:$0xff]
        %v446 = vld [vmem:[%s391 + $0x68] sm:$0xff]
        %v447 = vld [vmem:[%s391 + $0x70] sm:$0xff]
        %v448 = vld [vmem:[%s391 + $0x78] sm:$0xff]
        %v449 = vld [vmem:[%s2] sm:$0xf]
        %v450 = vld [vmem:[%s2 + $0x4] sm:$0xf]
        %v451 = vpack.c.bf16 %v435, %v433
        %v452 = vpack.c.bf16 %v436, %v434
        %v453 = vpack.c.bf16 %v439, %v437
        %v454 = vpack.c.bf16 %v440, %v438
        %v455 = vpack.c.bf16 %v443, %v441
        %v456 = vpack.c.bf16 %v444, %v442
        %v457 = vpack.c.bf16 %v447, %v445
        %v458 = vpack.c.bf16 %v448, %v446
        %v459 = vld [vmem:[%s3] sm:$0xff]
        %v460 = vld [vmem:[%s3 + $0x8] sm:$0xff]
        %462 = vset.pattern.permute.xlu0 0
        %463 = vperm.xlu0 %462, %v459
        %v464 = vpop.permute.xlu0 %463
        %467 = vset.pattern.permute.xlu0 0
        %468 = vperm.xlu0 %467, %v460
        %v469 = vpop.permute.xlu0 %468
        %v473 = vunpack.c.l.b16 %v449
        %v474 = vunpack.c.l.b16 %v450
        %v475 = vpack.c.b16 %v474, %v473
        %vm476 = vcmask 523264
        %v478 = vsel %vm476, %v475, 0
        %480 = vmatprep.subr.bf16.mxu0 %v452
        %481 = vmatpush1.bf16.msra.mxu0 %v451
        %482 = vmatprep.subr.bf16.mxu0 %v454
        %483 = vmatpush1.bf16.msra.mxu0 %v453
        %484 = vmatprep.subr.bf16.mxu0 %v456
        %485 = vmatpush1.bf16.msra.mxu0 %v455
        %486 = vmatprep.subr.bf16.mxu0 %v458
        %487 = vmatpush1.bf16.msra.mxu0 %v457
        %488 = vmatprep.subr.bf16.mxu0 0
        %489 = vmatpush1.bf16.msra.mxu0 0
        %490 = vmatprep.subr.bf16.mxu0 0
        %491 = vmatpush1.bf16.msra.mxu0 0
        %492 = vmatprep.subr.bf16.mxu0 0
        %493 = vmatpush1.bf16.msra.mxu0 0
        %494 = vmatprep.subr.bf16.mxu0 0
        %495 = vmatpush1.bf16.msra.mxu0 0
        %496 = vmatprep.subr.bf16.mxu0 0
        %497 = vmatpush1.bf16.msra.mxu0 0
        %498 = vmatprep.subr.bf16.mxu0 0
        %499 = vmatpush1.bf16.msra.mxu0 0
        %500 = vmatprep.subr.bf16.mxu0 0
        %501 = vmatpush1.bf16.msra.mxu0 0
        %502 = vmatprep.subr.bf16.mxu0 0
        %503 = vmatpush1.bf16.msra.mxu0 0
        %504 = vmatprep.subr.bf16.mxu0 0
        %505 = vmatpush1.bf16.msra.mxu0 0
        %506 = vmatprep.subr.bf16.mxu0 0
        %507 = vmatpush1.bf16.msra.mxu0 0
        %508 = vmatprep.subr.bf16.mxu0 0
        %509 = vmatpush1.bf16.msra.mxu0 0
        %510 = vmatprep.subr.bf16.mxu0 0
        %511 = vmatpush1.bf16.msra.mxu0 0
        %512 = vmatprep.mubr.bf16.mxu0 0
        %513 = vmatmul.mubr.bf16.gmra.mrb[0].mxu0 %v478
        %v514 = vpop.f32.mrb[0].mxu0
        %v515 = vadd.f32 %v464, %v514
        %v516 = vpop.f32.mrb[0].mxu0
        %v517 = vadd.f32 %v464, %v516
        %v518 = vpop.f32.mrb[0].mxu0
        %v519 = vadd.f32 %v469, %v518
        %v520 = vpop.f32.mrb[0].mxu0
        %v521 = vadd.f32 %v469, %v520
        %522 = vdwg.mxu0
        %v523 = vmax.f32 %v515, 0.0
        %v524 = vmax.f32 %v517, 0.0
        %v525 = vmax.f32 %v519, 0.0
        %v526 = vmax.f32 %v521, 0.0
        %v527 = vld [vmem:[%s1] sm:$0x3]
        %v529 = vlaneseq
        %v530 = vshrl.u32 %v529, 7
        %v531 = vsub.s32 0, %v530
        %v532 = vrot.slane %v527, %v531
        %v533 = vlaneseq
        %v534 = vshrl.u32 %v533, 7
        %v535 = vsub.s32 1, %v534
        %v536 = vrot.slane %v527, %v535
        %537 = vrot.lane.b32.xlu0 %v532, 111
        %v538 = vpop.permute.xlu0 %537
        %539 = vrot.lane.b32.xlu0 %v536, 111
        %v540 = vpop.permute.xlu0 %539
        %vm541 = vcmask 908288
        %v542 = vsel %vm541, %v538, %v540
        %v546 = vmul.f32 %v524, %v538
        %v547 = vmul.f32 %v523, %v542
        %v548 = vmul.f32 %v524, %v540
        %v549 = vmul.f32 %v526, %v538
        %v550 = vmul.f32 %v525, %v542
        %v551 = vmul.f32 %v526, %v540
        %s552 = scalar_lea.vmem %s1, 2
        %v553 = vld [vmem:[%s552] sm:$0x3]
        %v555 = vlaneseq
        %v556 = vshrl.u32 %v555, 7
        %v557 = vsub.s32 0, %v556
        %v558 = vrot.slane %v553, %v557
        %v559 = vlaneseq
        %v560 = vshrl.u32 %v559, 7
        %v561 = vsub.s32 1, %v560
        %v562 = vrot.slane %v553, %v561
        %563 = vrot.lane.b32.xlu0 %v558, 112
        %v564 = vpop.permute.xlu0 %563
        %565 = vrot.lane.b32.xlu0 %v562, 112
        %v566 = vpop.permute.xlu0 %565
        %vm567 = vcmask 916480
        %v568 = vsel %vm567, %v564, %v566
        %v572 = vmul.f32 %v524, %v564
        %v573 = vmul.f32 %v523, %v568
        %v574 = vmul.f32 %v524, %v566
        %v575 = vmul.f32 %v526, %v564
        %v576 = vmul.f32 %v525, %v568
        %v577 = vmul.f32 %v526, %v566
        %s578 = scalar_lea.vmem %s1, 4
        %v579 = vld [vmem:[%s578] sm:$0x3]
        %v581 = vlaneseq
        %v582 = vshrl.u32 %v581, 7
        %v583 = vsub.s32 0, %v582
        %v584 = vrot.slane %v579, %v583
        %v585 = vlaneseq
        %v586 = vshrl.u32 %v585, 7
        %v587 = vsub.s32 1, %v586
        %v588 = vrot.slane %v579, %v587
        %589 = vrot.lane.b32.xlu0 %v584, 113
        %v590 = vpop.permute.xlu0 %589
        %591 = vrot.lane.b32.xlu0 %v588, 113
        %v592 = vpop.permute.xlu0 %591
        %vm593 = vcmask 924672
        %v594 = vsel %vm593, %v590, %v592
        %v598 = vmul.f32 %v524, %v590
        %v599 = vmul.f32 %v523, %v594
        %v600 = vmul.f32 %v524, %v592
        %v601 = vmul.f32 %v526, %v590
        %v602 = vmul.f32 %v525, %v594
        %v603 = vmul.f32 %v526, %v592
        %s604 = scalar_lea.vmem %s1, 6
        %v605 = vld [vmem:[%s604] sm:$0x3]
        %v607 = vlaneseq
        %v608 = vshrl.u32 %v607, 7
        %v609 = vsub.s32 0, %v608
        %v610 = vrot.slane %v605, %v609
        %v611 = vlaneseq
        %v612 = vshrl.u32 %v611, 7
        %v613 = vsub.s32 1, %v612
        %v614 = vrot.slane %v605, %v613
        %615 = vrot.lane.b32.xlu0 %v610, 127
        %v616 = vpop.permute.xlu0 %615
        %617 = vrot.lane.b32.xlu0 %v614, 127
        %v618 = vpop.permute.xlu0 %617
        %vm619 = vcmask 1039360
        %v620 = vsel %vm619, %v616, %v618
        %v624 = vmul.f32 %v524, %v616
        %v625 = vmul.f32 %v523, %v620
        %v626 = vmul.f32 %v524, %v618
        %v627 = vmul.f32 %v526, %v616
        %v628 = vmul.f32 %v525, %v620
        %v629 = vmul.f32 %v526, %v618
        %s630 = scalar_lea.vmem %s1, 10
        %v631 = vld [vmem:[%s630] sm:$0x3]
        %v633 = vlaneseq
        %v634 = vshrl.u32 %v633, 7
        %v635 = vsub.s32 0, %v634
        %v636 = vrot.slane %v631, %v635
        %v637 = vlaneseq
        %v638 = vshrl.u32 %v637, 7
        %v639 = vsub.s32 1, %v638
        %v640 = vrot.slane %v631, %v639
        %641 = vrot.lane.b32.xlu0 %v636, 1
        %v642 = vpop.permute.xlu0 %641
        %643 = vrot.lane.b32.xlu0 %v640, 1
        %v644 = vpop.permute.xlu0 %643
        %vm645 = vcmask 7168
        %v646 = vsel %vm645, %v642, %v644
        %v650 = vmul.f32 %v523, %v642
        %v651 = vmul.f32 %v524, %v646
        %v652 = vmul.f32 %v523, %v644
        %v653 = vmul.f32 %v525, %v642
        %v654 = vmul.f32 %v526, %v646
        %v655 = vmul.f32 %v525, %v644
        %s656 = scalar_lea.vmem %s1, 12
        %v657 = vld [vmem:[%s656] sm:$0x3]
        %v659 = vlaneseq
        %v660 = vshrl.u32 %v659, 7
        %v661 = vsub.s32 0, %v660
        %v662 = vrot.slane %v657, %v661
        %v663 = vlaneseq
        %v664 = vshrl.u32 %v663, 7
        %v665 = vsub.s32 1, %v664
        %v666 = vrot.slane %v657, %v665
        %667 = vrot.lane.b32.xlu0 %v662, 15
        %v668 = vpop.permute.xlu0 %667
        %669 = vrot.lane.b32.xlu0 %v666, 15
        %v670 = vpop.permute.xlu0 %669
        %vm671 = vcmask 121856
        %v672 = vsel %vm671, %v668, %v670
        %v676 = vmul.f32 %v523, %v668
        %v677 = vmul.f32 %v524, %v672
        %v678 = vmul.f32 %v523, %v670
        %v679 = vmul.f32 %v525, %v668
        %v680 = vmul.f32 %v526, %v672
        %v681 = vmul.f32 %v525, %v670
        %s682 = scalar_lea.vmem %s1, 14
        %v683 = vld [vmem:[%s682] sm:$0x3]
        %v685 = vlaneseq
        %v686 = vshrl.u32 %v685, 7
        %v687 = vsub.s32 0, %v686
        %v688 = vrot.slane %v683, %v687
        %v689 = vlaneseq
        %v690 = vshrl.u32 %v689, 7
        %v691 = vsub.s32 1, %v690
        %v692 = vrot.slane %v683, %v691
        %693 = vrot.lane.b32.xlu0 %v688, 16
        %v694 = vpop.permute.xlu0 %693
        %695 = vrot.lane.b32.xlu0 %v692, 16
        %v696 = vpop.permute.xlu0 %695
        %vm697 = vcmask 130048
        %v698 = vsel %vm697, %v694, %v696
        %v702 = vmul.f32 %v523, %v694
        %v703 = vmul.f32 %v524, %v698
        %v704 = vmul.f32 %v523, %v696
        %v705 = vmul.f32 %v525, %v694
        %v706 = vmul.f32 %v526, %v698
        %v707 = vmul.f32 %v525, %v696
        %s708 = scalar_lea.vmem %s1, 16
        %v709 = vld [vmem:[%s708] sm:$0x3]
        %v711 = vlaneseq
        %v712 = vshrl.u32 %v711, 7
        %v713 = vsub.s32 0, %v712
        %v714 = vrot.slane %v709, %v713
        %v715 = vlaneseq
        %v716 = vshrl.u32 %v715, 7
        %v717 = vsub.s32 1, %v716
        %v718 = vrot.slane %v709, %v717
        %719 = vrot.lane.b32.xlu0 %v714, 17
        %v720 = vpop.permute.xlu0 %719
        %721 = vrot.lane.b32.xlu0 %v718, 17
        %v722 = vpop.permute.xlu0 %721
        %vm723 = vcmask 138240
        %v724 = vsel %vm723, %v720, %v722
        %v728 = vmul.f32 %v523, %v720
        %v729 = vmul.f32 %v524, %v724
        %v730 = vmul.f32 %v523, %v722
        %v731 = vmul.f32 %v525, %v720
        %v732 = vmul.f32 %v526, %v724
        %v733 = vmul.f32 %v525, %v722
        %740 = vrot.lane.b32.xlu0 %v572, 127
        %v741 = vpop.permute.xlu0 %740
        %742 = vrot.lane.b32.xlu0 %v573, 127
        %v743 = vpop.permute.xlu0 %742
        %744 = vrot.lane.b32.xlu0 %v574, 127
        %v745 = vpop.permute.xlu0 %744
        %746 = vrot.lane.b32.xlu0 %v575, 127
        %v747 = vpop.permute.xlu0 %746
        %748 = vrot.lane.b32.xlu0 %v576, 127
        %v749 = vpop.permute.xlu0 %748
        %750 = vrot.lane.b32.xlu0 %v577, 127
        %v751 = vpop.permute.xlu0 %750
        %v752 = vsel %vm619, %v741, %v743
        %v753 = vsel %vm619, %v743, %v745
        %v754 = vsel %vm619, %v747, %v749
        %v755 = vsel %vm619, %v749, %v751
        %768 = vrot.lane.b32.xlu0 %v598, 126
        %v769 = vpop.permute.xlu0 %768
        %770 = vrot.lane.b32.xlu0 %v599, 126
        %v771 = vpop.permute.xlu0 %770
        %772 = vrot.lane.b32.xlu0 %v600, 126
        %v773 = vpop.permute.xlu0 %772
        %774 = vrot.lane.b32.xlu0 %v601, 126
        %v775 = vpop.permute.xlu0 %774
        %776 = vrot.lane.b32.xlu0 %v602, 126
        %v777 = vpop.permute.xlu0 %776
        %778 = vrot.lane.b32.xlu0 %v603, 126
        %v779 = vpop.permute.xlu0 %778
        %vm780 = vcmask 1031168
        %v781 = vsel %vm780, %v769, %v771
        %v782 = vsel %vm780, %v771, %v773
        %v783 = vsel %vm780, %v775, %v777
        %v784 = vsel %vm780, %v777, %v779
        %797 = vrot.lane.b32.xlu0 %v624, 112
        %v798 = vpop.permute.xlu0 %797
        %799 = vrot.lane.b32.xlu0 %v625, 112
        %v800 = vpop.permute.xlu0 %799
        %801 = vrot.lane.b32.xlu0 %v626, 112
        %v802 = vpop.permute.xlu0 %801
        %803 = vrot.lane.b32.xlu0 %v627, 112
        %v804 = vpop.permute.xlu0 %803
        %805 = vrot.lane.b32.xlu0 %v628, 112
        %v806 = vpop.permute.xlu0 %805
        %807 = vrot.lane.b32.xlu0 %v629, 112
        %v808 = vpop.permute.xlu0 %807
        %v809 = vsel %vm567, %v798, %v800
        %v810 = vsel %vm567, %v800, %v802
        %v811 = vsel %vm567, %v804, %v806
        %v812 = vsel %vm567, %v806, %v808
        %823 = vrot.lane.b32.xlu0 %v523, 111
        %v824 = vpop.permute.xlu0 %823
        %825 = vrot.lane.b32.xlu0 %v524, 111
        %v826 = vpop.permute.xlu0 %825
        %827 = vrot.lane.b32.xlu0 %v525, 111
        %v828 = vpop.permute.xlu0 %827
        %829 = vrot.lane.b32.xlu0 %v526, 111
        %v830 = vpop.permute.xlu0 %829
        %v831 = vsel %vm541, %v824, %v826
        %v832 = vsel %vm541, %v828, %v830
        %845 = vrot.lane.b32.xlu0 %v650, 110
        %v846 = vpop.permute.xlu0 %845
        %847 = vrot.lane.b32.xlu0 %v651, 110
        %v848 = vpop.permute.xlu0 %847
        %849 = vrot.lane.b32.xlu0 %v652, 110
        %v850 = vpop.permute.xlu0 %849
        %851 = vrot.lane.b32.xlu0 %v653, 110
        %v852 = vpop.permute.xlu0 %851
        %853 = vrot.lane.b32.xlu0 %v654, 110
        %v854 = vpop.permute.xlu0 %853
        %855 = vrot.lane.b32.xlu0 %v655, 110
        %v856 = vpop.permute.xlu0 %855
        %vm857 = vcmask 900096
        %v858 = vsel %vm857, %v846, %v848
        %v859 = vsel %vm857, %v848, %v850
        %v860 = vsel %vm857, %v852, %v854
        %v861 = vsel %vm857, %v854, %v856
        %874 = vrot.lane.b32.xlu0 %v676, 96
        %v875 = vpop.permute.xlu0 %874
        %876 = vrot.lane.b32.xlu0 %v677, 96
        %v877 = vpop.permute.xlu0 %876
        %878 = vrot.lane.b32.xlu0 %v678, 96
        %v879 = vpop.permute.xlu0 %878
        %880 = vrot.lane.b32.xlu0 %v679, 96
        %v881 = vpop.permute.xlu0 %880
        %882 = vrot.lane.b32.xlu0 %v680, 96
        %v883 = vpop.permute.xlu0 %882
        %884 = vrot.lane.b32.xlu0 %v681, 96
        %v885 = vpop.permute.xlu0 %884
        %vm886 = vcmask 785408
        %v887 = vsel %vm886, %v875, %v877
        %v888 = vsel %vm886, %v877, %v879
        %v889 = vsel %vm886, %v881, %v883
        %v890 = vsel %vm886, %v883, %v885
        %903 = vrot.lane.b32.xlu0 %v702, 95
        %v904 = vpop.permute.xlu0 %903
        %905 = vrot.lane.b32.xlu0 %v703, 95
        %v906 = vpop.permute.xlu0 %905
        %907 = vrot.lane.b32.xlu0 %v704, 95
        %v908 = vpop.permute.xlu0 %907
        %909 = vrot.lane.b32.xlu0 %v705, 95
        %v910 = vpop.permute.xlu0 %909
        %911 = vrot.lane.b32.xlu0 %v706, 95
        %v912 = vpop.permute.xlu0 %911
        %913 = vrot.lane.b32.xlu0 %v707, 95
        %v914 = vpop.permute.xlu0 %913
        %vm915 = vcmask 777216
        %v916 = vsel %vm915, %v904, %v906
        %v917 = vsel %vm915, %v906, %v908
        %v918 = vsel %vm915, %v910, %v912
        %v919 = vsel %vm915, %v912, %v914
        %932 = vrot.lane.b32.xlu0 %v728, 94
        %v933 = vpop.permute.xlu0 %932
        %934 = vrot.lane.b32.xlu0 %v729, 94
        %v935 = vpop.permute.xlu0 %934
        %936 = vrot.lane.b32.xlu0 %v730, 94
        %v937 = vpop.permute.xlu0 %936
        %938 = vrot.lane.b32.xlu0 %v731, 94
        %v939 = vpop.permute.xlu0 %938
        %940 = vrot.lane.b32.xlu0 %v732, 94
        %v941 = vpop.permute.xlu0 %940
        %942 = vrot.lane.b32.xlu0 %v733, 94
        %v943 = vpop.permute.xlu0 %942
        %vm944 = vcmask 769024
        %v945 = vsel %vm944, %v933, %v935
        %v946 = vsel %vm944, %v935, %v937
        %v947 = vsel %vm944, %v939, %v941
        %v948 = vsel %vm944, %v941, %v943
        %v955 = vpack.c.bf16 %v549, %v546
        %v956 = vpack.c.bf16 %v550, %v547
        %v957 = vpack.c.bf16 %v551, %v548
        %v958 = vpack.c.bf16 %v754, %v752
        %v959 = vpack.c.bf16 %v755, %v753
        %v960 = vpack.c.bf16 %v751, %v745
        %v961 = vpack.c.bf16 %v783, %v781
        %v962 = vpack.c.bf16 %v784, %v782
        %v963 = vpack.c.bf16 %v779, %v773
        %v964 = vpack.c.bf16 %v811, %v809
        %v965 = vpack.c.bf16 %v812, %v810
        %v966 = vpack.c.bf16 %v808, %v802
        %v967 = vpack.c.bf16 %v828, %v824
        %v968 = vpack.c.bf16 %v832, %v831
        %v969 = vpack.c.bf16 %v830, %v826
        %v970 = vpack.c.bf16 %v852, %v846
        %v971 = vpack.c.bf16 %v860, %v858
        %v972 = vpack.c.bf16 %v861, %v859
        %v973 = vpack.c.bf16 %v881, %v875
        %v974 = vpack.c.bf16 %v889, %v887
        %v975 = vpack.c.bf16 %v890, %v888
        %v976 = vpack.c.bf16 %v910, %v904
        %v977 = vpack.c.bf16 %v918, %v916
        %v978 = vpack.c.bf16 %v919, %v917
        %v979 = vpack.c.bf16 %v939, %v933
        %v980 = vpack.c.bf16 %v947, %v945
        %v981 = vpack.c.bf16 %v948, %v946
        %v982 = vld [vmem:[%s4] sm:$0xff]
        %v983 = vld [vmem:[%s4 + $0x8] sm:$0xff]
        %v984 = vld [vmem:[%s5] sm:$0xff]
        %v985 = vld [vmem:[%s5 + $0x8] sm:$0xff]
        %987 = vset.pattern.permute.xlu0 0
        %988 = vperm.xlu0 %987, %v984
        %v989 = vpop.permute.xlu0 %988
        %992 = vset.pattern.permute.xlu0 0
        %993 = vperm.xlu0 %992, %v985
        %v994 = vpop.permute.xlu0 %993
        %v998 = vunpack.c.l.b16 %v982
        %v999 = vunpack.c.h.b16 %v982
        %v1000 = vunpack.c.l.b16 %v983
        %v1001 = vunpack.c.h.b16 %v983
        %v1002 = vpack.c.b16 %v1000, %v998
        %v1003 = vpack.c.b16 %v1001, %v999
        %1032 = vrot.lane.b32.xlu0 %v955, 17
        %v1033 = vpop.permute.xlu0 %1032
        %1034 = vrot.lane.b32.xlu0 %v956, 17
        %v1035 = vpop.permute.xlu0 %1034
        %1036 = vrot.lane.b32.xlu0 %v957, 17
        %v1037 = vpop.permute.xlu0 %1036
        %1038 = vrot.lane.b32.xlu0 %v958, 17
        %v1039 = vpop.permute.xlu0 %1038
        %1040 = vrot.lane.b32.xlu0 %v959, 17
        %v1041 = vpop.permute.xlu0 %1040
        %1042 = vrot.lane.b32.xlu0 %v960, 17
        %v1043 = vpop.permute.xlu0 %1042
        %1044 = vrot.lane.b32.xlu0 %v961, 17
        %v1045 = vpop.permute.xlu0 %1044
        %1046 = vrot.lane.b32.xlu0 %v962, 17
        %v1047 = vpop.permute.xlu0 %1046
        %1048 = vrot.lane.b32.xlu0 %v963, 17
        %v1049 = vpop.permute.xlu0 %1048
        %1050 = vrot.lane.b32.xlu0 %v964, 17
        %v1051 = vpop.permute.xlu0 %1050
        %1052 = vrot.lane.b32.xlu0 %v965, 17
        %v1053 = vpop.permute.xlu0 %1052
        %1054 = vrot.lane.b32.xlu0 %v966, 17
        %v1055 = vpop.permute.xlu0 %1054
        %1056 = vrot.lane.b32.xlu0 %v967, 17
        %v1057 = vpop.permute.xlu0 %1056
        %1058 = vrot.lane.b32.xlu0 %v968, 17
        %v1059 = vpop.permute.xlu0 %1058
        %1060 = vrot.lane.b32.xlu0 %v969, 17
        %v1061 = vpop.permute.xlu0 %1060
        %1062 = vrot.lane.b32.xlu0 %v970, 17
        %v1063 = vpop.permute.xlu0 %1062
        %1064 = vrot.lane.b32.xlu0 %v971, 17
        %v1065 = vpop.permute.xlu0 %1064
        %1066 = vrot.lane.b32.xlu0 %v972, 17
        %v1067 = vpop.permute.xlu0 %1066
        %1068 = vrot.lane.b32.xlu0 %v973, 17
        %v1069 = vpop.permute.xlu0 %1068
        %1070 = vrot.lane.b32.xlu0 %v974, 17
        %v1071 = vpop.permute.xlu0 %1070
        %1072 = vrot.lane.b32.xlu0 %v975, 17
        %v1073 = vpop.permute.xlu0 %1072
        %1074 = vrot.lane.b32.xlu0 %v976, 17
        %v1075 = vpop.permute.xlu0 %1074
        %1076 = vrot.lane.b32.xlu0 %v977, 17
        %v1077 = vpop.permute.xlu0 %1076
        %1078 = vrot.lane.b32.xlu0 %v978, 17
        %v1079 = vpop.permute.xlu0 %1078
        %1080 = vrot.lane.b32.xlu0 %v979, 17
        %v1081 = vpop.permute.xlu0 %1080
        %1082 = vrot.lane.b32.xlu0 %v980, 17
        %v1083 = vpop.permute.xlu0 %1082
        %1084 = vrot.lane.b32.xlu0 %v981, 17
        %v1085 = vpop.permute.xlu0 %1084
        %vm1086 = vcmask 138240
        %v1087 = vsel %vm1086, %v1033, %v1035
        %v1088 = vsel %vm1086, %v1035, %v1037
        %v1089 = vsel %vm1086, %v1039, %v1041
        %v1090 = vsel %vm1086, %v1041, %v1043
        %v1091 = vsel %vm1086, %v1045, %v1047
        %v1092 = vsel %vm1086, %v1047, %v1049
        %v1093 = vsel %vm1086, %v1051, %v1053
        %v1094 = vsel %vm1086, %v1053, %v1055
        %v1095 = vsel %vm1086, %v1057, %v1059
        %v1096 = vsel %vm1086, %v1059, %v1061
        %v1097 = vsel %vm1086, %v1063, %v1065
        %v1098 = vsel %vm1086, %v1065, %v1067
        %v1099 = vsel %vm1086, %v1069, %v1071
        %v1100 = vsel %vm1086, %v1071, %v1073
        %v1101 = vsel %vm1086, %v1075, %v1077
        %v1102 = vsel %vm1086, %v1077, %v1079
        %v1103 = vsel %vm1086, %v1081, %v1083
        %v1104 = vsel %vm1086, %v1083, %v1085
        %v1124 = vsel %vm697, %v1003, 0
        %1126 = vmatprep.subr.bf16.mxu0 %v1088
        %1127 = vmatpush1.bf16.msra.mxu0 %v1087
        %1128 = vmatprep.subr.bf16.mxu0 %v1090
        %1129 = vmatpush1.bf16.msra.mxu0 %v1089
        %1130 = vmatprep.subr.bf16.mxu0 %v1092
        %1131 = vmatpush1.bf16.msra.mxu0 %v1091
        %1132 = vmatprep.subr.bf16.mxu0 %v1094
        %1133 = vmatpush1.bf16.msra.mxu0 %v1093
        %1134 = vmatprep.subr.bf16.mxu0 %v1096
        %1135 = vmatpush1.bf16.msra.mxu0 %v1095
        %1136 = vmatprep.subr.bf16.mxu0 %v1098
        %1137 = vmatpush1.bf16.msra.mxu0 %v1097
        %1138 = vmatprep.subr.bf16.mxu0 %v1100
        %1139 = vmatpush1.bf16.msra.mxu0 %v1099
        %1140 = vmatprep.subr.bf16.mxu0 %v1102
        %1141 = vmatpush1.bf16.msra.mxu0 %v1101
        %1142 = vmatprep.subr.bf16.mxu0 %v1104
        %1143 = vmatpush1.bf16.msra.mxu0 %v1103
        %1144 = vmatprep.subr.bf16.mxu0 0
        %1145 = vmatpush1.bf16.msra.mxu0 0
        %1146 = vmatprep.subr.bf16.mxu0 0
        %1147 = vmatpush1.bf16.msra.mxu0 0
        %1148 = vmatprep.subr.bf16.mxu0 0
        %1149 = vmatpush1.bf16.msra.mxu0 0
        %1150 = vmatprep.subr.bf16.mxu0 0
        %1151 = vmatpush1.bf16.msra.mxu0 0
        %1152 = vmatprep.subr.bf16.mxu0 0
        %1153 = vmatpush1.bf16.msra.mxu0 0
        %1154 = vmatprep.subr.bf16.mxu0 0
        %1155 = vmatpush1.bf16.msra.mxu0 0
        %1156 = vmatprep.subr.bf16.mxu0 0
        %1157 = vmatpush1.bf16.msra.mxu0 0
        %1158 = vmatprep.mubr.bf16.mxu0 %v1124
        %1159 = vmatmul.mubr.bf16.gmra.mrb[0].mxu0 %v1002
        %v1160 = vpop.f32.mrb[0].mxu0
        %v1161 = vadd.f32 %v989, %v1160
        %v1162 = vpop.f32.mrb[0].mxu0
        %v1163 = vadd.f32 %v989, %v1162
        %v1164 = vpop.f32.mrb[0].mxu0
        %v1165 = vadd.f32 %v994, %v1164
        %v1166 = vpop.f32.mrb[0].mxu0
        %v1167 = vadd.f32 %v994, %v1166
        %1168 = vdwg.mxu0
        %v1169 = vmax.f32 %v1161, 0.0
        %v1170 = vmax.f32 %v1163, 0.0
        %v1171 = vmax.f32 %v1165, 0.0
        %v1172 = vmax.f32 %v1167, 0.0
        %v1173 = vld [vmem:[%s6] sm:$0xf]
        %v1174 = vld [vmem:[%s6 + $0x4] sm:$0xf]
        %v1175 = vld [vmem:[%s6 + $0x8] sm:$0xf]
        %v1176 = vld [vmem:[%s6 + $0xc] sm:$0xf]
        %v1177 = vld [vmem:[%s6 + $0x10] sm:$0xf]
        %v1178 = vld [vmem:[%s6 + $0x14] sm:$0xf]
        %v1179 = vld [vmem:[%s6 + $0x18] sm:$0xf]
        %v1180 = vld [vmem:[%s6 + $0x1c] sm:$0xf]
        %v1181 = vpack.c.bf16 %v1171, %v1169
        %v1182 = vpack.c.bf16 %v1172, %v1170
        %v1183 = vld [vmem:[%s7] sm:$0xff]
        %v1184 = vld [vmem:[%s7 + $0x8] sm:$0xff]
        %v1185 = vld [vmem:[%s7 + $0x10] sm:$0xff]
        %v1186 = vld [vmem:[%s7 + $0x18] sm:$0xff]
        %v1187 = vld [vmem:[%s7 + $0x20] sm:$0xff]
        %v1188 = vld [vmem:[%s7 + $0x28] sm:$0xff]
        %v1189 = vld [vmem:[%s7 + $0x30] sm:$0xff]
        %v1190 = vld [vmem:[%s7 + $0x38] sm:$0xff]
        %1192 = vset.pattern.permute.xlu0 0
        %1193 = vperm.xlu0 %1192, %v1183
        %v1194 = vpop.permute.xlu0 %1193
        %1197 = vset.pattern.permute.xlu0 0
        %1198 = vperm.xlu0 %1197, %v1184
        %v1199 = vpop.permute.xlu0 %1198
        %1202 = vset.pattern.permute.xlu0 0
        %1203 = vperm.xlu0 %1202, %v1185
        %v1204 = vpop.permute.xlu0 %1203
        %1207 = vset.pattern.permute.xlu0 0
        %1208 = vperm.xlu0 %1207, %v1186
        %v1209 = vpop.permute.xlu0 %1208
        %1212 = vset.pattern.permute.xlu0 0
        %1213 = vperm.xlu0 %1212, %v1187
        %v1214 = vpop.permute.xlu0 %1213
        %1217 = vset.pattern.permute.xlu0 0
        %1218 = vperm.xlu0 %1217, %v1188
        %v1219 = vpop.permute.xlu0 %1218
        %1222 = vset.pattern.permute.xlu0 0
        %1223 = vperm.xlu0 %1222, %v1189
        %v1224 = vpop.permute.xlu0 %1223
        %1227 = vset.pattern.permute.xlu0 0
        %1228 = vperm.xlu0 %1227, %v1190
        %v1229 = vpop.permute.xlu0 %1228
        %v1239 = vunpack.c.l.b16 %v1173
        %v1240 = vunpack.c.l.b16 %v1174
        %v1241 = vunpack.c.l.b16 %v1175
        %v1242 = vunpack.c.l.b16 %v1176
        %v1243 = vunpack.c.l.b16 %v1177
        %v1244 = vunpack.c.l.b16 %v1178
        %v1245 = vunpack.c.l.b16 %v1179
        %v1246 = vunpack.c.l.b16 %v1180
        %v1247 = vpack.c.b16 %v1240, %v1239
        %v1248 = vpack.c.b16 %v1242, %v1241
        %v1249 = vpack.c.b16 %v1244, %v1243
        %v1250 = vpack.c.b16 %v1246, %v1245
        %v1252 = vsel %vm697, %v1247, 0
        %v1255 = vsel %vm697, %v1248, 0
        %v1258 = vsel %vm697, %v1249, 0
        %v1261 = vsel %vm697, %v1250, 0
        %1263 = vmatprep.subr.bf16.mxu0 %v1182
        %1264 = vmatpush1.bf16.msra.mxu0 %v1181
        %1265 = vmatprep.subr.bf16.mxu0 0
        %1266 = vmatpush1.bf16.msra.mxu0 0
        %1267 = vmatprep.subr.bf16.mxu0 0
        %1268 = vmatpush1.bf16.msra.mxu0 0
        %1269 = vmatprep.subr.bf16.mxu0 0
        %1270 = vmatpush1.bf16.msra.mxu0 0
        %1271 = vmatprep.subr.bf16.mxu0 0
        %1272 = vmatpush1.bf16.msra.mxu0 0
        %1273 = vmatprep.subr.bf16.mxu0 0
        %1274 = vmatpush1.bf16.msra.mxu0 0
        %1275 = vmatprep.subr.bf16.mxu0 0
        %1276 = vmatpush1.bf16.msra.mxu0 0
        %1277 = vmatprep.subr.bf16.mxu0 0
        %1278 = vmatpush1.bf16.msra.mxu0 0
        %1279 = vmatprep.subr.bf16.mxu0 0
        %1280 = vmatpush1.bf16.msra.mxu0 0
        %1281 = vmatprep.subr.bf16.mxu0 0
        %1282 = vmatpush1.bf16.msra.mxu0 0
        %1283 = vmatprep.subr.bf16.mxu0 0
        %1284 = vmatpush1.bf16.msra.mxu0 0
        %1285 = vmatprep.subr.bf16.mxu0 0
        %1286 = vmatpush1.bf16.msra.mxu0 0
        %1287 = vmatprep.subr.bf16.mxu0 0
        %1288 = vmatpush1.bf16.msra.mxu0 0
        %1289 = vmatprep.subr.bf16.mxu0 0
        %1290 = vmatpush1.bf16.msra.mxu0 0
        %1291 = vmatprep.subr.bf16.mxu0 0
        %1292 = vmatpush1.bf16.msra.mxu0 0
        %1293 = vmatprep.subr.bf16.mxu0 0
        %1294 = vmatpush1.bf16.msra.mxu0 0
        %1295 = vmatprep.mubr.bf16.mxu0 0
        %1296 = vmatmul.mubr.bf16.gmra.mrb[0].mxu0 %v1252
        %v1297 = vpop.f32.mrb[0].mxu0
        %v1298 = vadd.f32 %v1194, %v1297
        %v1299 = vpop.f32.mrb[0].mxu0
        %v1300 = vadd.f32 %v1194, %v1299
        %v1301 = vpop.f32.mrb[0].mxu0
        %v1302 = vadd.f32 %v1199, %v1301
        %v1303 = vpop.f32.mrb[0].mxu0
        %v1304 = vadd.f32 %v1199, %v1303
        %1305 = vmatprep.mubr.bf16.mxu0 0
        %1306 = vmatmul.mubr.bf16.gmra.mrb[0].mxu0 %v1255
        %v1307 = vpop.f32.mrb[0].mxu0
        %v1308 = vadd.f32 %v1204, %v1307
        %v1309 = vpop.f32.mrb[0].mxu0
        %v1310 = vadd.f32 %v1204, %v1309
        %v1311 = vpop.f32.mrb[0].mxu0
        %v1312 = vadd.f32 %v1209, %v1311
        %v1313 = vpop.f32.mrb[0].mxu0
        %v1314 = vadd.f32 %v1209, %v1313
        %1315 = vmatprep.mubr.bf16.mxu0 0
        %1316 = vmatmul.mubr.bf16.gmra.mrb[0].mxu0 %v1258
        %v1317 = vpop.f32.mrb[0].mxu0
        %v1318 = vadd.f32 %v1214, %v1317
        %v1319 = vpop.f32.mrb[0].mxu0
        %v1320 = vadd.f32 %v1214, %v1319
        %v1321 = vpop.f32.mrb[0].mxu0
        %v1322 = vadd.f32 %v1219, %v1321
        %v1323 = vpop.f32.mrb[0].mxu0
        %v1324 = vadd.f32 %v1219, %v1323
        %1325 = vmatprep.mubr.bf16.mxu0 0
        %1326 = vmatmul.mubr.bf16.gmra.mrb[0].mxu0 %v1261
        %v1327 = vpop.f32.mrb[0].mxu0
        %v1328 = vadd.f32 %v1224, %v1327
        %v1329 = vpop.f32.mrb[0].mxu0
        %v1330 = vadd.f32 %v1224, %v1329
        %v1331 = vpop.f32.mrb[0].mxu0
        %v1332 = vadd.f32 %v1229, %v1331
        %v1333 = vpop.f32.mrb[0].mxu0
        %v1334 = vadd.f32 %v1229, %v1333
        %1335 = vdwg.mxu0
        %v1336 = vadd.f32 %v1298, %v1300
        %1337 = vadd.xlane.f32.xlu0 %v1336
        %v1338 = vpop.xlane.xlu0 %1337
        %v1339 = vadd.f32 %v1302, %v1304
        %1340 = vadd.xlane.f32.xlu0 %v1339
        %v1341 = vpop.xlane.xlu0 %1340
        %v1342 = vadd.f32 %v1308, %v1310
        %1343 = vadd.xlane.f32.xlu0 %v1342
        %v1344 = vpop.xlane.xlu0 %1343
        %v1345 = vadd.f32 %v1312, %v1314
        %1346 = vadd.xlane.f32.xlu0 %v1345
        %v1347 = vpop.xlane.xlu0 %1346
        %v1348 = vadd.f32 %v1318, %v1320
        %1349 = vadd.xlane.f32.xlu0 %v1348
        %v1350 = vpop.xlane.xlu0 %1349
        %v1351 = vadd.f32 %v1322, %v1324
        %1352 = vadd.xlane.f32.xlu0 %v1351
        %v1353 = vpop.xlane.xlu0 %1352
        %v1354 = vadd.f32 %v1328, %v1330
        %1355 = vadd.xlane.f32.xlu0 %v1354
        %v1356 = vpop.xlane.xlu0 %1355
        %v1357 = vadd.f32 %v1332, %v1334
        %1358 = vadd.xlane.f32.xlu0 %v1357
        %v1359 = vpop.xlane.xlu0 %1358
        %v1360 = vrcp.pop 256.0
        %v1361 = vmul.f32 %v1338, %v1360
        %v1362 = vmul.f32 %v1341, %v1360
        %v1363 = vmul.f32 %v1344, %v1360
        %v1364 = vmul.f32 %v1347, %v1360
        %v1365 = vmul.f32 %v1350, %v1360
        %v1366 = vmul.f32 %v1353, %v1360
        %v1367 = vmul.f32 %v1356, %v1360
        %v1368 = vmul.f32 %v1359, %v1360
        %v1369 = vld [vmem:[%s8] sm:$0xff]
        %v1370 = vld [vmem:[%s8 + $0x8] sm:$0xff]
        %v1371 = vmul.f32 %v1298, %v1361
        %v1372 = vmul.f32 %v1300, %v1361
        %v1373 = vmul.f32 %v1302, %v1362
        %v1374 = vmul.f32 %v1304, %v1362
        %v1375 = vmul.f32 %v1308, %v1363
        %v1376 = vmul.f32 %v1310, %v1363
        %v1377 = vmul.f32 %v1312, %v1364
        %v1378 = vmul.f32 %v1314, %v1364
        %v1379 = vmul.f32 %v1318, %v1365
        %v1380 = vmul.f32 %v1320, %v1365
        %v1381 = vmul.f32 %v1322, %v1366
        %v1382 = vmul.f32 %v1324, %v1366
        %v1383 = vmul.f32 %v1328, %v1367
        %v1384 = vmul.f32 %v1330, %v1367
        %v1385 = vmul.f32 %v1332, %v1368
        %v1386 = vmul.f32 %v1334, %v1368
        %v1388 = vsel %vm476, %v1369, 0
        %v1391 = vsel %vm476, %v1370, 0
        %1393 = vmatprep.subr.mxu0 %v1372
        %1394 = vmatpush1.msra.mxu0 %v1371
        %1395 = vmatprep.subr.mxu0 %v1374
        %1396 = vmatpush1.msra.mxu0 %v1373
        %1397 = vmatprep.subr.mxu0 %v1376
        %1398 = vmatpush1.msra.mxu0 %v1375
        %1399 = vmatprep.subr.mxu0 %v1378
        %1400 = vmatpush1.msra.mxu0 %v1377
        %1401 = vmatprep.subr.mxu0 %v1380
        %1402 = vmatpush1.msra.mxu0 %v1379
        %1403 = vmatprep.subr.mxu0 %v1382
        %1404 = vmatpush1.msra.mxu0 %v1381
        %1405 = vmatprep.subr.mxu0 %v1384
        %1406 = vmatpush1.msra.mxu0 %v1383
        %1407 = vmatprep.subr.mxu0 %v1386
        %1408 = vmatpush1.msra.mxu0 %v1385
        %1409 = vmatprep.subr.mxu0 0.0
        %1410 = vmatpush1.msra.mxu0 0.0
        %1411 = vmatprep.subr.mxu0 0.0
        %1412 = vmatpush1.msra.mxu0 0.0
        %1413 = vmatprep.subr.mxu0 0.0
        %1414 = vmatpush1.msra.mxu0 0.0
        %1415 = vmatprep.subr.mxu0 0.0
        %1416 = vmatpush1.msra.mxu0 0.0
        %1417 = vmatprep.subr.mxu0 0.0
        %1418 = vmatpush1.msra.mxu0 0.0
        %1419 = vmatprep.subr.mxu0 0.0
        %1420 = vmatpush1.msra.mxu0 0.0
        %1421 = vmatprep.subr.mxu0 0.0
        %1422 = vmatpush1.msra.mxu0 0.0
        %1423 = vmatprep.subr.mxu0 0.0
        %1424 = vmatpush1.msra.mxu0 0.0
        %1425 = vmatprep.subr.mxu0 0.0
        %1426 = vmatpush1.msra.mxu0 0.0
        %1427 = vmatprep.subr.mxu0 0.0
        %1428 = vmatpush1.msra.mxu0 0.0
        %1429 = vmatprep.subr.mxu0 0.0
        %1430 = vmatpush1.msra.mxu0 0.0
        %1431 = vmatprep.subr.mxu0 0.0
        %1432 = vmatpush1.msra.mxu0 0.0
        %1433 = vmatprep.subr.mxu0 0.0
        %1434 = vmatpush1.msra.mxu0 0.0
        %1435 = vmatprep.subr.mxu0 0.0
        %1436 = vmatpush1.msra.mxu0 0.0
        %1437 = vmatprep.subr.mxu0 0.0
        %1438 = vmatpush1.msra.mxu0 0.0
        %1439 = vmatprep.subr.mxu0 0.0
        %1440 = vmatpush1.msra.mxu0 0.0
        %1441 = vmatprep.subr.mxu0 0.0
        %1442 = vmatpush1.msra.mxu0 0.0
        %1443 = vmatprep.subr.mxu0 0.0
        %1444 = vmatpush1.msra.mxu0 0.0
        %1445 = vmatprep.subr.mxu0 0.0
        %1446 = vmatpush1.msra.mxu0 0.0
        %1447 = vmatprep.subr.mxu0 0.0
        %1448 = vmatpush1.msra.mxu0 0.0
        %1449 = vmatprep.subr.mxu0 0.0
        %1450 = vmatpush1.msra.mxu0 0.0
        %1451 = vmatprep.subr.mxu0 0.0
        %1452 = vmatpush1.msra.mxu0 0.0
        %1453 = vmatprep.subr.mxu0 0.0
        %1454 = vmatpush1.msra.mxu0 0.0
        %1455 = vmatprep.subr.mxu0 0.0
        %1456 = vmatpush1.msra.mxu0 0.0
        %1457 = vmatprep.mubr.f32.mxu0 0.0
        %1458 = vmatmul.mubr.f32.gmra.mrb[0].mxu0 %v1388
        %v1459 = vpop.f32.mrb[0].mxu0
        %v1460 = vadd.f32 0.0, %v1459
        %v1461 = vpop.f32.mrb[0].mxu0
        %v1462 = vadd.f32 0.0, %v1461
        %1463 = vmatprep.mubr.f32.mxu0 0.0
        %1464 = vmatmul.mubr.f32.gmra.mrb[0].mxu0 %v1391
        %v1465 = vpop.f32.mrb[0].mxu0
        %v1466 = vadd.f32 0.0, %v1465
        %v1467 = vpop.f32.mrb[0].mxu0
        %v1468 = vadd.f32 0.0, %v1467
        %1469 = vdwg.mxu0
        %v1470 = vadd.f32 %v1460, %v1462
        %1471 = vadd.xlane.f32.xlu0 %v1470
        %v1472 = vpop.xlane.xlu0 %1471
        %v1473 = vadd.f32 %v1466, %v1468
        %1474 = vadd.xlane.f32.xlu0 %v1473
        %v1475 = vpop.xlane.xlu0 %1474
        %v1476 = vmul.f32 %v1472, %v1360
        %v1477 = vmul.f32 %v1475, %v1360
        %v1478 = vsub.f32 %v1460, %v1476
        %v1479 = vsub.f32 %v1462, %v1476
        %v1480 = vsub.f32 %v1466, %v1477
        %v1481 = vsub.f32 %v1468, %v1477
        %v1482 = vmul.f32 %v1478, %v1478
        %v1483 = vmul.f32 %v1479, %v1479
        %v1484 = vmul.f32 %v1480, %v1480
        %v1485 = vmul.f32 %v1481, %v1481
        %v1486 = vadd.f32 %v1482, %v1483
        %1487 = vadd.xlane.f32.xlu0 %v1486
        %v1488 = vpop.xlane.xlu0 %1487
        %v1489 = vadd.f32 %v1484, %v1485
        %1490 = vadd.xlane.f32.xlu0 %v1489
        %v1491 = vpop.xlane.xlu0 %1490
        %v1492 = vrcp.pop 255.0
        %v1493 = vmul.f32 %v1488, %v1492
        %v1494 = vmul.f32 %v1491, %v1492
        %v1495 = vrsqrt.pop %v1493
        %v1496 = vmul.f32 %v1493, %v1495
        %vm1497 = vcmp.eq.f32.partialorder %v1493, inf
        %v1498 = vsel %vm1497, %v1493, %v1496
        %vm1499 = vcmp.eq.f32.partialorder %v1493, 0.0
        %v1500 = vand.u32 %v1493, 2147483648
        %v1501 = vsel %vm1499, %v1500, %v1498
        %v1502 = vrsqrt.pop %v1494
        %v1503 = vmul.f32 %v1494, %v1502
        %vm1504 = vcmp.eq.f32.partialorder %v1494, inf
        %v1505 = vsel %vm1504, %v1494, %v1503
        %vm1506 = vcmp.eq.f32.partialorder %v1494, 0.0
        %v1507 = vand.u32 %v1494, 2147483648
        %v1508 = vsel %vm1506, %v1507, %v1505
        %v1509 = vadd.f32 %v1501, 1e-05
        %v1510 = vadd.f32 %v1508, 1e-05
        %v1511 = vrcp.pop %v1509
        %v1512 = vmul.f32 %v1478, %v1511
        %v1513 = vmul.f32 %v1479, %v1511
        %v1514 = vrcp.pop %v1510
        %v1515 = vmul.f32 %v1480, %v1514
        %v1516 = vmul.f32 %v1481, %v1514
        %v1517 = vld [vmem:[%s10] sm:$0xff]
        %v1518 = vld [vmem:[%s10 + $0x8] sm:$0xff]
        %1520 = vset.pattern.permute.xlu0 0
        %1521 = vperm.xlu0 %1520, %v1517
        %v1522 = vpop.permute.xlu0 %1521
        %1525 = vset.pattern.permute.xlu0 0
        %1526 = vperm.xlu0 %1525, %v1518
        %v1527 = vpop.permute.xlu0 %1526
        %v1529 = vmul.f32 %v1512, %v1522
        %v1530 = vmul.f32 %v1513, %v1522
        %v1531 = vmul.f32 %v1515, %v1527
        %v1532 = vmul.f32 %v1516, %v1527
        %v1533 = vld [vmem:[%s11] sm:$0xff]
        %v1534 = vld [vmem:[%s11 + $0x8] sm:$0xff]
        %1536 = vset.pattern.permute.xlu0 0
        %1537 = vperm.xlu0 %1536, %v1533
        %v1538 = vpop.permute.xlu0 %1537
        %1541 = vset.pattern.permute.xlu0 0
        %1542 = vperm.xlu0 %1541, %v1534
        %v1543 = vpop.permute.xlu0 %1542
        %v1545 = vadd.f32 %v1529, %v1538
        %v1546 = vadd.f32 %v1530, %v1538
        %v1547 = vadd.f32 %v1531, %v1543
        %v1548 = vadd.f32 %v1532, %v1543
        %v1549 = vsub.f32 0.0, %v1545
        %v1550 = vsub.f32 0.0, %v1546
        %v1551 = vsub.f32 0.0, %v1547
        %v1552 = vsub.f32 0.0, %v1548
        %v1553 = vmul.f32 %v1549, 1.442695
        %v1554 = vpow.pop %v1553
        %v1555 = vmul.f32 %v1550, 1.442695
        %v1556 = vpow.pop %v1555
        %v1557 = vmul.f32 %v1551, 1.442695
        %v1558 = vpow.pop %v1557
        %v1559 = vmul.f32 %v1552, 1.442695
        %v1560 = vpow.pop %v1559
        %v1561 = vadd.f32 %v1554, 1.0
        %v1562 = vadd.f32 %v1556, 1.0
        %v1563 = vadd.f32 %v1558, 1.0
        %v1564 = vadd.f32 %v1560, 1.0
        %v1565 = vrcp.pop %v1561
        %v1566 = vrcp.pop %v1562
        %v1567 = vrcp.pop %v1563
        %v1568 = vrcp.pop %v1564
        %v1569 = vld [vmem:[%s9] sm:$0xff]
        %v1570 = vld [vmem:[%s9 + $0x8] sm:$0xff]
        %v1571 = vld [vmem:[%s9 + $0x10] sm:$0xff]
        %v1572 = vld [vmem:[%s9 + $0x18] sm:$0xff]
        %v1573 = vld [vmem:[%s9 + $0x20] sm:$0xff]
        %v1574 = vld [vmem:[%s9 + $0x28] sm:$0xff]
        %v1575 = vld [vmem:[%s9 + $0x30] sm:$0xff]
        %v1576 = vld [vmem:[%s9 + $0x38] sm:$0xff]
        %v1578 = vsel %vm697, %v1569, 0
        %v1581 = vsel %vm697, %v1570, 0
        %v1584 = vsel %vm697, %v1571, 0
        %v1587 = vsel %vm697, %v1572, 0
        %v1590 = vsel %vm697, %v1573, 0
        %v1593 = vsel %vm697, %v1574, 0
        %v1596 = vsel %vm697, %v1575, 0
        %v1599 = vsel %vm697, %v1576, 0
        %1601 = vmatprep.subr.mxu0 %v1566
        %1602 = vmatpush1.msra.mxu0 %v1565
        %1603 = vmatprep.subr.mxu0 %v1568
        %1604 = vmatpush1.msra.mxu0 %v1567
        %1605 = vmatprep.subr.mxu0 0.0
        %1606 = vmatpush1.msra.mxu0 0.0
        %1607 = vmatprep.subr.mxu0 0.0
        %1608 = vmatpush1.msra.mxu0 0.0
        %1609 = vmatprep.subr.mxu0 0.0
        %1610 = vmatpush1.msra.mxu0 0.0
        %1611 = vmatprep.subr.mxu0 0.0
        %1612 = vmatpush1.msra.mxu0 0.0
        %1613 = vmatprep.subr.mxu0 0.0
        %1614 = vmatpush1.msra.mxu0 0.0
        %1615 = vmatprep.subr.mxu0 0.0
        %1616 = vmatpush1.msra.mxu0 0.0
        %1617 = vmatprep.subr.mxu0 0.0
        %1618 = vmatpush1.msra.mxu0 0.0
        %1619 = vmatprep.subr.mxu0 0.0
        %1620 = vmatpush1.msra.mxu0 0.0
        %1621 = vmatprep.subr.mxu0 0.0
        %1622 = vmatpush1.msra.mxu0 0.0
        %1623 = vmatprep.subr.mxu0 0.0
        %1624 = vmatpush1.msra.mxu0 0.0
        %1625 = vmatprep.subr.mxu0 0.0
        %1626 = vmatpush1.msra.mxu0 0.0
        %1627 = vmatprep.subr.mxu0 0.0
        %1628 = vmatpush1.msra.mxu0 0.0
        %1629 = vmatprep.subr.mxu0 0.0
        %1630 = vmatpush1.msra.mxu0 0.0
        %1631 = vmatprep.subr.mxu0 0.0
        %1632 = vmatpush1.msra.mxu0 0.0
        %1633 = vmatprep.subr.mxu0 0.0
        %1634 = vmatpush1.msra.mxu0 0.0
        %1635 = vmatprep.subr.mxu0 0.0
        %1636 = vmatpush1.msra.mxu0 0.0
        %1637 = vmatprep.subr.mxu0 0.0
        %1638 = vmatpush1.msra.mxu0 0.0
        %1639 = vmatprep.subr.mxu0 0.0
        %1640 = vmatpush1.msra.mxu0 0.0
        %1641 = vmatprep.subr.mxu0 0.0
        %1642 = vmatpush1.msra.mxu0 0.0
        %1643 = vmatprep.subr.mxu0 0.0
        %1644 = vmatpush1.msra.mxu0 0.0
        %1645 = vmatprep.subr.mxu0 0.0
        %1646 = vmatpush1.msra.mxu0 0.0
        %1647 = vmatprep.subr.mxu0 0.0
        %1648 = vmatpush1.msra.mxu0 0.0
        %1649 = vmatprep.subr.mxu0 0.0
        %1650 = vmatpush1.msra.mxu0 0.0
        %1651 = vmatprep.subr.mxu0 0.0
        %1652 = vmatpush1.msra.mxu0 0.0
        %1653 = vmatprep.subr.mxu0 0.0
        %1654 = vmatpush1.msra.mxu0 0.0
        %1655 = vmatprep.subr.mxu0 0.0
        %1656 = vmatpush1.msra.mxu0 0.0
        %1657 = vmatprep.subr.mxu0 0.0
        %1658 = vmatpush1.msra.mxu0 0.0
        %1659 = vmatprep.subr.mxu0 0.0
        %1660 = vmatpush1.msra.mxu0 0.0
        %1661 = vmatprep.subr.mxu0 0.0
        %1662 = vmatpush1.msra.mxu0 0.0
        %1663 = vmatprep.subr.mxu0 0.0
        %1664 = vmatpush1.msra.mxu0 0.0
        %1665 = vmatprep.mubr.f32.mxu0 0.0
        %1666 = vmatmul.mubr.f32.gmra.mrb[0].mxu0 %v1578
        %v1667 = vpop.f32.mrb[0].mxu0
        %v1668 = vadd.f32 0.0, %v1667
        %v1669 = vpop.f32.mrb[0].mxu0
        %v1670 = vadd.f32 0.0, %v1669
        %1671 = vmatprep.mubr.f32.mxu0 0.0
        %1672 = vmatmul.mubr.f32.gmra.mrb[0].mxu0 %v1581
        %v1673 = vpop.f32.mrb[0].mxu0
        %v1674 = vadd.f32 0.0, %v1673
        %v1675 = vpop.f32.mrb[0].mxu0
        %v1676 = vadd.f32 0.0, %v1675
        %1677 = vmatprep.mubr.f32.mxu0 0.0
        %1678 = vmatmul.mubr.f32.gmra.mrb[0].mxu0 %v1584
        %v1679 = vpop.f32.mrb[0].mxu0
        %v1680 = vadd.f32 0.0, %v1679
        %v1681 = vpop.f32.mrb[0].mxu0
        %v1682 = vadd.f32 0.0, %v1681
        %1683 = vmatprep.mubr.f32.mxu0 0.0
        %1684 = vmatmul.mubr.f32.gmra.mrb[0].mxu0 %v1587
        %v1685 = vpop.f32.mrb[0].mxu0
        %v1686 = vadd.f32 0.0, %v1685
        %v1687 = vpop.f32.mrb[0].mxu0
        %v1688 = vadd.f32 0.0, %v1687
        %1689 = vmatprep.mubr.f32.mxu0 0.0
        %1690 = vmatmul.mubr.f32.gmra.mrb[0].mxu0 %v1590
        %v1691 = vpop.f32.mrb[0].mxu0
        %v1692 = vadd.f32 0.0, %v1691
        %v1693 = vpop.f32.mrb[0].mxu0
        %v1694 = vadd.f32 0.0, %v1693
        %1695 = vmatprep.mubr.f32.mxu0 0.0
        %1696 = vmatmul.mubr.f32.gmra.mrb[0].mxu0 %v1593
        %v1697 = vpop.f32.mrb[0].mxu0
        %v1698 = vadd.f32 0.0, %v1697
        %v1699 = vpop.f32.mrb[0].mxu0
        %v1700 = vadd.f32 0.0, %v1699
        %1701 = vmatprep.mubr.f32.mxu0 0.0
        %1702 = vmatmul.mubr.f32.gmra.mrb[0].mxu0 %v1596
        %v1703 = vpop.f32.mrb[0].mxu0
        %v1704 = vadd.f32 0.0, %v1703
        %v1705 = vpop.f32.mrb[0].mxu0
        %v1706 = vadd.f32 0.0, %v1705
        %1707 = vmatprep.mubr.f32.mxu0 0.0
        %1708 = vmatmul.mubr.f32.gmra.mrb[0].mxu0 %v1599
        %v1709 = vpop.f32.mrb[0].mxu0
        %v1710 = vadd.f32 0.0, %v1709
        %v1711 = vpop.f32.mrb[0].mxu0
        %v1712 = vadd.f32 0.0, %v1711
        %1713 = vdwg.mxu0
        %v1714 = vmul.f32 %v1298, %v1668
        %v1715 = vmul.f32 %v1300, %v1670
        %v1716 = vmul.f32 %v1302, %v1674
        %v1717 = vmul.f32 %v1304, %v1676
        %v1718 = vmul.f32 %v1308, %v1680
        %v1719 = vmul.f32 %v1310, %v1682
        %v1720 = vmul.f32 %v1312, %v1686
        %v1721 = vmul.f32 %v1314, %v1688
        %v1722 = vmul.f32 %v1318, %v1692
        %v1723 = vmul.f32 %v1320, %v1694
        %v1724 = vmul.f32 %v1322, %v1698
        %v1725 = vmul.f32 %v1324, %v1700
        %v1726 = vmul.f32 %v1328, %v1704
        %v1727 = vmul.f32 %v1330, %v1706
        %v1728 = vmul.f32 %v1332, %v1710
        %v1729 = vmul.f32 %v1334, %v1712
        %v1730 = vadd.f32 %v1714, %v433
        %v1731 = vadd.f32 %v1715, %v434
        %v1732 = vadd.f32 %v1716, %v435
        %v1733 = vadd.f32 %v1717, %v436
        %v1734 = vadd.f32 %v1718, %v437
        %v1735 = vadd.f32 %v1719, %v438
        %v1736 = vadd.f32 %v1720, %v439
        %v1737 = vadd.f32 %v1721, %v440
        %v1738 = vadd.f32 %v1722, %v441
        %v1739 = vadd.f32 %v1723, %v442
        %v1740 = vadd.f32 %v1724, %v443
        %v1741 = vadd.f32 %v1725, %v444
        %v1742 = vadd.f32 %v1726, %v445
        %v1743 = vadd.f32 %v1727, %v446
        %v1744 = vadd.f32 %v1728, %v447
        %v1745 = vadd.f32 %v1729, %v448
        %v1746 = vmax.f32 %v1730, 0.0
        %v1747 = vmax.f32 %v1731, 0.0
        %v1748 = vmax.f32 %v1732, 0.0
        %v1749 = vmax.f32 %v1733, 0.0
        %v1750 = vmax.f32 %v1734, 0.0
        %v1751 = vmax.f32 %v1735, 0.0
        %v1752 = vmax.f32 %v1736, 0.0
        %v1753 = vmax.f32 %v1737, 0.0
        %v1754 = vmax.f32 %v1738, 0.0
        %v1755 = vmax.f32 %v1739, 0.0
        %v1756 = vmax.f32 %v1740, 0.0
        %v1757 = vmax.f32 %v1741, 0.0
        %v1758 = vmax.f32 %v1742, 0.0
        %v1759 = vmax.f32 %v1743, 0.0
        %v1760 = vmax.f32 %v1744, 0.0
        %v1761 = vmax.f32 %v1745, 0.0
        %1762 = vst [vmem:[%s431] sm:$0xff] %v1746
        %1763 = vst [vmem:[%s431 + $0x8] sm:$0xff] %v1747
        %1764 = vst [vmem:[%s431 + $0x10] sm:$0xff] %v1748
        %1765 = vst [vmem:[%s431 + $0x18] sm:$0xff] %v1749
        %1766 = vst [vmem:[%s431 + $0x20] sm:$0xff] %v1750
        %1767 = vst [vmem:[%s431 + $0x28] sm:$0xff] %v1751
        %1768 = vst [vmem:[%s431 + $0x30] sm:$0xff] %v1752
        %1769 = vst [vmem:[%s431 + $0x38] sm:$0xff] %v1753
        %1770 = vst [vmem:[%s431 + $0x40] sm:$0xff] %v1754
        %1771 = vst [vmem:[%s431 + $0x48] sm:$0xff] %v1755
        %1772 = vst [vmem:[%s431 + $0x50] sm:$0xff] %v1756
        %1773 = vst [vmem:[%s431 + $0x58] sm:$0xff] %v1757
        %1774 = vst [vmem:[%s431 + $0x60] sm:$0xff] %v1758
        %1775 = vst [vmem:[%s431 + $0x68] sm:$0xff] %v1759
        %1776 = vst [vmem:[%s431 + $0x70] sm:$0xff] %v1760
        %1777 = vst [vmem:[%s431 + $0x78] sm:$0xff] %v1761
        %s1778 = sand.u32 %s294, 1
        %s1779 = scalar_lea.sflag [#allocation4], %s1778
        %s1780 = sand.u32 %s294, 1
        %s1781 = smul.addr %s1780, 128
        %s1782 = scalar_lea.vmem [#allocation5], %s1781
        // Predicated region
        $region73: #{tpu_custom_call.1} parent=67 // pred_check
          %p1783 = pneg %p304
        $region74: #{tpu_custom_call.1} parent=67 // pred_check_branch
          %1785 = sbr.rel (%p1783) target = $region76
        $region75: #{tpu_custom_call.1} parent=67 // pred_region
          %s1787 = ssub.s32 2048, 2048
          %1788 = vsyncadd %s1779, %s1787
          %s1789 = smul.addr %s29, 16
          %s1790 = smul.addr %s1789, 128
          %s1791 = scalar_lea.hbm %s12, %s1790
          %s1792 = sshll.u32 %s1782, 4
          %s1793 = int_to_ptr.vmem [resolvable:$true] %s1792
          %1798 = dma.vmem_to_hbm [thread:$0]  %s1793, 2048, %s1791, %s1779, 256, 256, 16
        $region76: #{tpu_custom_call.1} parent=67 // pred_fallthru
          _
      $region68: #{tpu_custom_call.1} parent=5 // pred_fallthru
        _
      %p1799 = scmp.le.s32.totalorder 2, %s24
      // Predicated region
      $region77: #{tpu_custom_call.1} parent=5 // pred_check
        %p1800 = pneg %p1799
      $region78: #{tpu_custom_call.1} parent=5 // pred_check_branch
        %1802 = sbr.rel (%p1800) target = $region80
      $region79: #{tpu_custom_call.1} parent=5 // pred_region
        %s1803 = ssub.s32 %s24, 2
        // Predicated region
        $region81: #{tpu_custom_call.1} parent=79 // pred_check
          %p1804 = pneg %p310
        $region82: #{tpu_custom_call.1} parent=79 // pred_check_branch
          %1806 = sbr.rel (%p1804) target = $region84
        $region83: #{tpu_custom_call.1} parent=79 // pred_region
          %s1807 = sand.u32 %s295, 1
          %s1808 = scalar_lea.sflag [#allocation4], %s1807
          %s1809 = sand.u32 %s295, 1
          %s1810 = smul.addr %s1809, 128
          %s1811 = scalar_lea.vmem [#allocation5], %s1810
          %1812 = dma.done %s1808, 2048
        $region84: #{tpu_custom_call.1} parent=79 // pred_fallthru
          _
      $region80: #{tpu_custom_call.1} parent=5 // pred_fallthru
        _
    $region6: #{tpu_custom_call.1} parent=1 // loop_footer
      %s28 = sadd.s32 1, %s24
    $region7: #{tpu_custom_call.1} parent=1 // loop_footer_branch
      %23 = sbr.rel target = $region3
    $region8: #{tpu_custom_call.1} parent=1 // loop_exit
      _
    %1813 = vsyncpa [#allocation3], 1
    %s1814 = scalar_lea.sflag [#allocation3], 1
    %1815 = vsyncpa %s1814, 1
    %1816 = vsyncpa [#allocation4], 1
    %s1817 = scalar_lea.sflag [#allocation4], 1
    %1818 = vsyncpa %s1817, 1

</llo_original>
